<compile_context>
chip_gen: v7x
topology: tpu7x:2x2x1
jax: 0.10.0
libtpu: 0.0.40
codegen_flags: <defaults>
</compile_context>

<pallas_src>
import jax
import jax.numpy as jnp
from jax.experimental import pallas as pl
from jax.experimental.pallas import tpu as pltpu

INPUT_DIM = 28 * 28 * 1
HIDDEN_DIM = 200          # hidden_dim from the reference script
HID_PAD = 256             # lane-dense hidden width (zero-padded, exact results)
OUTPUT_DIM = 20           # small synthetic class hierarchy
OUT_PAD = 128             # lane-dense output width (sliced back to OUTPUT_DIM)
NUM_LAYERS = 3            # hyperparams['num_layers']


def _cdiv(a, b):
    return -(-a // b)


def _round_up(n, m):
    return ((n + m - 1) // m) * m


def _choose_tiles(B, tb):
    """Pick the batch tile TB (multiple of 8) and number of grid steps.

    Keeps tiles large (amortize per-step overhead / MXU drain) but ensures the
    grid has >= 2 steps when the batch allows it, so dimension_semantics
    ("parallel",) can split the batch across v7x's two TensorCores."""
    if B <= 16:
        TB = _round_up(B, 8)
    else:
        nsteps = max(2, _cdiv(B, tb))
        TB = min(tb, _round_up(_cdiv(B, nsteps), 8))
    return TB, _cdiv(B, TB)


def chmcnn_kernel(x_ref, w0_ref, b0_ref, w1_ref, b1_ref, w2_ref, b2_ref,
                  rt_ref, out_ref):
    # x arrives as f32 straight from HBM; cast to bf16 on the VPU (hidden
    # under the MXU) instead of paying a separate XLA convert pass.
    x = x_ref[...].astype(jnp.bfloat16)                                 # (TB, 784)

    # layer 0: Linear(784, 200->256 padded) + ReLU   (dropout = identity, eval mode)
    h = jnp.dot(x, w0_ref[...], preferred_element_type=jnp.float32) + b0_ref[...]
    h = jnp.maximum(h, 0.0)                                             # (TB, 256) f32

    # layer 1: Linear(200->256, 200->256) + ReLU   (dropout = identity, eval mode)
    h = jnp.dot(h.astype(jnp.bfloat16), w1_ref[...],
                preferred_element_type=jnp.float32) + b1_ref[...]
    h = jnp.maximum(h, 0.0)                                             # (TB, 256) f32

    # layer 2 (last): Linear(200->256, 20->128 padded), no non-linearity.
    y = jnp.dot(h.astype(jnp.bfloat16), w2_ref[...],
                preferred_element_type=jnp.float32) + b2_ref[...]       # (TB, 128) f32

    # get_constr_out: out[b, i] = max_j R[i, j] * y[b, j]
    # rt[j, :] holds column j of R, zero-padded to OUT_PAD lanes.
    rt = rt_ref[...]                                                    # (20, 128) hoisted load
    acc = y[:, 0:1] * rt[0:1, :]                                        # (TB, 128)
    for j in range(1, OUTPUT_DIM):                                      # 20-step unrolled VPU max
        acc = jnp.maximum(acc, y[:, j:j + 1] * rt[j:j + 1, :])
    out_ref[...] = acc


def prepare_params(params, R):
    """One-time weight preparation: transpose-layout weights -> bf16, zero-pad
    hidden (200->256) and output (20->128) dims, build R^T padded to 128 lanes."""
    w0, b0, w1, b1, w2, b2 = params
    w0p = jnp.zeros((INPUT_DIM, HID_PAD), jnp.bfloat16).at[:, :HIDDEN_DIM].set(
        w0.astype(jnp.bfloat16))
    b0p = jnp.zeros((1, HID_PAD), jnp.float32).at[:, :HIDDEN_DIM].set(b0)
    w1p = jnp.zeros((HID_PAD, HID_PAD), jnp.bfloat16).at[:HIDDEN_DIM, :HIDDEN_DIM].set(
        w1.astype(jnp.bfloat16))
    b1p = jnp.zeros((1, HID_PAD), jnp.float32).at[:, :HIDDEN_DIM].set(b1)
    w2p = jnp.zeros((HID_PAD, OUT_PAD), jnp.bfloat16).at[:HIDDEN_DIM, :OUTPUT_DIM].set(
        w2.astype(jnp.bfloat16))
    b2p = jnp.zeros((1, OUT_PAD), jnp.float32).at[:, :OUTPUT_DIM].set(b2)
    rt = jnp.zeros((OUTPUT_DIM, OUT_PAD), jnp.float32).at[:, :OUTPUT_DIM].set(
        R.astype(jnp.float32).T)
    return (w0p, b0p, w1p, b1p, w2p, b2p, rt)


def constrained_ffnn_forward(x, prepped, *, tb=1024):
    """x: (B, 1, 28, 28) float32 -> (B, OUTPUT_DIM) float32 constrained output."""
    w0, b0, w1, b1, w2, b2, rt = prepped

    # Flatten only (free layout op); NO dtype cast and NO batch padding here.
    x2 = x.reshape(-1, INPUT_DIM)                                       # (B, 784) f32
    B = x2.shape[0]

    TB, nblk = _choose_tiles(B, tb)
    grid = (nblk,)

    resident = lambda shape: pl.BlockSpec(shape, lambda i: (0, 0))      # VMEM-resident params
    in_specs = [
        pl.BlockSpec((TB, INPUT_DIM), lambda i: (i, 0)),                # x tile streams (f32)
        resident((INPUT_DIM, HID_PAD)),                                 # w0
        resident((1, HID_PAD)),                                         # b0
        resident((HID_PAD, HID_PAD)),                                   # w1
        resident((1, HID_PAD)),                                         # b1
        resident((HID_PAD, OUT_PAD)),                                   # w2 (lane-dense)
        resident((1, OUT_PAD)),                                         # b2 (lane-dense)
        resident((OUTPUT_DIM, OUT_PAD)),                                # R^T (padded)
    ]
    out_specs = pl.BlockSpec((TB, OUT_PAD), lambda i: (i, 0))           # lane-dense output

    flops = 2 * B * (INPUT_DIM * HID_PAD + HID_PAD * HID_PAD + HID_PAD * OUT_PAD)
    bytes_accessed = (x2.size * 4                                       # f32 x
                      + (w0.size + w1.size + w2.size) * 2               # bf16 weights
                      + (b0.size + b1.size + b2.size + rt.size) * 4     # f32 biases + R^T
                      + B * OUT_PAD * 4)                                # f32 output

    out = pl.pallas_call(
        chmcnn_kernel,
        out_shape=jax.ShapeDtypeStruct((B, OUT_PAD), jnp.float32),
        grid=grid,
        in_specs=in_specs,
        out_specs=out_specs,
        compiler_params=pltpu.CompilerParams(
            dimension_semantics=("parallel",)),
        cost_estimate=pl.CostEstimate(flops=flops, transcendentals=0,
                                      bytes_accessed=bytes_accessed),
    )(x2, w0, b0, w1, b1, w2, b2, rt)

    return out[:, :OUTPUT_DIM]


def init_params(key):
    """Deterministic PyTorch-Linear-style init: U(-1/sqrt(fan_in), 1/sqrt(fan_in)).
    Weights stored transposed -> (in_features, out_features), f32."""
    dims = [(INPUT_DIM, HIDDEN_DIM), (HIDDEN_DIM, HIDDEN_DIM), (HIDDEN_DIM, OUTPUT_DIM)]
    params = []
    for (fan_in, fan_out) in dims:
        key, kw, kb = jax.random.split(key, 3)
        bound = 1.0 / jnp.sqrt(float(fan_in))
        w = jax.random.uniform(kw, (fan_in, fan_out), jnp.float32, -bound, bound)
        b = jax.random.uniform(kb, (1, fan_out), jnp.float32, -bound, bound)
        params += [w, b]
    return tuple(params)


def make_R(num_classes):
    """Deterministic synthetic hierarchy matrix R (0/1 float):
    R[i, j] = 1 iff j is in the sub-hierarchy of i (here: a small lower band)."""
    i = jnp.arange(num_classes)[:, None]
    j = jnp.arange(num_classes)[None, :]
    return ((j <= i) & (i - j <= 3)).astype(jnp.float32)


def reference_forward(x, params, R):
    """Pure-JAX reference of the same eval-mode forward (precision-matched bf16 matmuls)."""
    w0, b0, w1, b1, w2, b2 = params
    h = x.reshape(-1, INPUT_DIM).astype(jnp.bfloat16)
    h = jnp.maximum(jnp.dot(h, w0.astype(jnp.bfloat16),
                            preferred_element_type=jnp.float32) + b0, 0.0)
    h = jnp.maximum(jnp.dot(h.astype(jnp.bfloat16), w1.astype(jnp.bfloat16),
                            preferred_element_type=jnp.float32) + b1, 0.0)
    y = jnp.dot(h.astype(jnp.bfloat16), w2.astype(jnp.bfloat16),
                preferred_element_type=jnp.float32) + b2
    return jnp.max(y[:, None, :] * R.astype(jnp.float32)[None, :, :], axis=-1)


if __name__ == "__main__":
    params = init_params(jax.random.PRNGKey(0))
    R = make_R(OUTPUT_DIM)
    prepped = prepare_params(params, R)

    key = jax.random.PRNGKey(0)

    # Small sanity check (B=2, single 8-row tile, masked stores on rows 2..7).
    key, kx = jax.random.split(key)
    x_small = jax.random.normal(kx, (2, 1, 28, 28), jnp.float32)        # NCHW-style input
    out_small = jax.block_until_ready(constrained_ffnn_forward(x_small, prepped))
    ref_small = reference_forward(x_small, params, R)
    assert out_small.shape == (2, OUTPUT_DIM)
    assert jnp.allclose(out_small, ref_small, atol=1e-3, rtol=1e-3), \
        "mismatch vs JAX reference (B=2)"

    # Two even pipelined grid steps (384 -> 2 x 192 tiles), no batch padding.
    key, kx = jax.random.split(key)
    x_big = jax.random.normal(kx, (384, 1, 28, 28), jnp.float32)
    out_big = jax.block_until_ready(constrained_ffnn_forward(x_big, prepped))
    ref_big = reference_forward(x_big, params, R)
    assert out_big.shape == (384, OUTPUT_DIM)
    assert jnp.allclose(out_big, ref_big, atol=1e-3, rtol=1e-3), \
        "mismatch vs JAX reference (B=384)"

    # Ragged last block (500 -> 256 + 244 rows): exercises masked partial-block writes.
    key, kx = jax.random.split(key)
    x_rag = jax.random.normal(kx, (500, 1, 28, 28), jnp.float32)
    out_rag = jax.block_until_ready(constrained_ffnn_forward(x_rag, prepped))
    ref_rag = reference_forward(x_rag, params, R)
    assert out_rag.shape == (500, OUTPUT_DIM)
    assert jnp.allclose(out_rag, ref_rag, atol=1e-3, rtol=1e-3), \
        "mismatch vs JAX reference (B=500, ragged tile)"

    print("KERNEL_OK")
</pallas_src>

<mosaic_0001>
module attributes {stable_mosaic.version = 11 : i64} {
  func.func @chmcnn_kernel(%arg0: i32, %arg1: memref<8x784xf32, #tpu.memory_space<vmem>>, %arg2: memref<784x256xbf16, #tpu.memory_space<vmem>>, %arg3: memref<1x256xf32, #tpu.memory_space<vmem>>, %arg4: memref<256x256xbf16, #tpu.memory_space<vmem>>, %arg5: memref<1x256xf32, #tpu.memory_space<vmem>>, %arg6: memref<256x128xbf16, #tpu.memory_space<vmem>>, %arg7: memref<1x128xf32, #tpu.memory_space<vmem>>, %arg8: memref<20x128xf32, #tpu.memory_space<vmem>>, %arg9: memref<8x128xf32, #tpu.memory_space<vmem>>) attributes {dimension_semantics = [#tpu.dimension_semantics<parallel>], iteration_bounds = array<i64: 1>, scalar_prefetch = 0 : i64, scratch_operands = 0 : i64, tpu.core_type = #tpu.core_type<tc>, window_params = [{transform_indices = @transform_0, window_bounds = array<i64: 8, 784>}, {pipeline_mode = #tpu.pipeline_mode<synchronous>, transform_indices = @transform_1, window_bounds = array<i64: 784, 256>}, {pipeline_mode = #tpu.pipeline_mode<synchronous>, transform_indices = @transform_2, window_bounds = array<i64: 1, 256>}, {pipeline_mode = #tpu.pipeline_mode<synchronous>, transform_indices = @transform_3, window_bounds = array<i64: 256, 256>}, {pipeline_mode = #tpu.pipeline_mode<synchronous>, transform_indices = @transform_4, window_bounds = array<i64: 1, 256>}, {pipeline_mode = #tpu.pipeline_mode<synchronous>, transform_indices = @transform_5, window_bounds = array<i64: 256, 128>}, {pipeline_mode = #tpu.pipeline_mode<synchronous>, transform_indices = @transform_6, window_bounds = array<i64: 1, 128>}, {pipeline_mode = #tpu.pipeline_mode<synchronous>, transform_indices = @transform_7, window_bounds = array<i64: 20, 128>}, {transform_indices = @transform_8, window_bounds = array<i64: 8, 128>}]} {
    %c0 = arith.constant 0 : index
    %c0_0 = arith.constant 0 : index
    %0 = vector.load %arg1[%c0, %c0_0] : memref<8x784xf32, #tpu.memory_space<vmem>>, vector<8x784xf32>
    %1 = arith.truncf %0 : vector<8x784xf32> to vector<8x784xbf16>
    %c0_1 = arith.constant 0 : index
    %c0_2 = arith.constant 0 : index
    %2 = vector.load %arg2[%c0_1, %c0_2] : memref<784x256xbf16, #tpu.memory_space<vmem>>, vector<784x256xbf16>
    %cst = arith.constant dense<0.000000e+00> : vector<8x256xf32>
    %3 = tpu.matmul %1, %2, %cst {dimension_numbers = #tpu.dot_dimension_numbers<[1], [0], [0], [1], [0, 0, 1, 1], [], []>} : vector<8x784xbf16>, vector<784x256xbf16>, vector<8x256xf32> -> vector<8x256xf32>
    %c0_3 = arith.constant 0 : index
    %c0_4 = arith.constant 0 : index
    %4 = vector.load %arg3[%c0_3, %c0_4] : memref<1x256xf32, #tpu.memory_space<vmem>>, vector<1x256xf32>
    %5 = vector.broadcast %4 : vector<1x256xf32> to vector<8x256xf32>
    %6 = arith.addf %3, %5 : vector<8x256xf32>
    %cst_5 = arith.constant 0.000000e+00 : f32
    %7 = vector.broadcast %cst_5 : f32 to vector<8x256xf32>
    %8 = arith.maximumf %6, %7 : vector<8x256xf32>
    %9 = arith.truncf %8 : vector<8x256xf32> to vector<8x256xbf16>
    %c0_6 = arith.constant 0 : index
    %c0_7 = arith.constant 0 : index
    %10 = vector.load %arg4[%c0_6, %c0_7] : memref<256x256xbf16, #tpu.memory_space<vmem>>, vector<256x256xbf16>
    %cst_8 = arith.constant dense<0.000000e+00> : vector<8x256xf32>
    %11 = tpu.matmul %9, %10, %cst_8 {dimension_numbers = #tpu.dot_dimension_numbers<[1], [0], [0], [1], [0, 0, 1, 1], [], []>} : vector<8x256xbf16>, vector<256x256xbf16>, vector<8x256xf32> -> vector<8x256xf32>
    %c0_9 = arith.constant 0 : index
    %c0_10 = arith.constant 0 : index
    %12 = vector.load %arg5[%c0_9, %c0_10] : memref<1x256xf32, #tpu.memory_space<vmem>>, vector<1x256xf32>
    %13 = vector.broadcast %12 : vector<1x256xf32> to vector<8x256xf32>
    %14 = arith.addf %11, %13 : vector<8x256xf32>
    %cst_11 = arith.constant 0.000000e+00 : f32
    %15 = vector.broadcast %cst_11 : f32 to vector<8x256xf32>
    %16 = arith.maximumf %14, %15 : vector<8x256xf32>
    %17 = arith.truncf %16 : vector<8x256xf32> to vector<8x256xbf16>
    %c0_12 = arith.constant 0 : index
    %c0_13 = arith.constant 0 : index
    %18 = vector.load %arg6[%c0_12, %c0_13] : memref<256x128xbf16, #tpu.memory_space<vmem>>, vector<256x128xbf16>
    %cst_14 = arith.constant dense<0.000000e+00> : vector<8x128xf32>
    %19 = tpu.matmul %17, %18, %cst_14 {dimension_numbers = #tpu.dot_dimension_numbers<[1], [0], [0], [1], [0, 0, 1, 1], [], []>} : vector<8x256xbf16>, vector<256x128xbf16>, vector<8x128xf32> -> vector<8x128xf32>
    %c0_15 = arith.constant 0 : index
    %c0_16 = arith.constant 0 : index
    %20 = vector.load %arg7[%c0_15, %c0_16] : memref<1x128xf32, #tpu.memory_space<vmem>>, vector<1x128xf32>
    %21 = vector.broadcast %20 : vector<1x128xf32> to vector<8x128xf32>
    %22 = arith.addf %19, %21 : vector<8x128xf32>
    %c0_17 = arith.constant 0 : index
    %c0_18 = arith.constant 0 : index
    %23 = vector.load %arg8[%c0_17, %c0_18] : memref<20x128xf32, #tpu.memory_space<vmem>>, vector<20x128xf32>
    %24 = vector.extract_strided_slice %22 {offsets = [0, 0], sizes = [8, 1], strides = [1, 1]} : vector<8x128xf32> to vector<8x1xf32>
    %25 = vector.extract_strided_slice %23 {offsets = [0, 0], sizes = [1, 128], strides = [1, 1]} : vector<20x128xf32> to vector<1x128xf32>
    %26 = vector.broadcast %24 : vector<8x1xf32> to vector<8x128xf32>
    %27 = vector.broadcast %25 : vector<1x128xf32> to vector<8x128xf32>
    %28 = arith.mulf %26, %27 : vector<8x128xf32>
    %29 = vector.extract_strided_slice %22 {offsets = [0, 1], sizes = [8, 1], strides = [1, 1]} : vector<8x128xf32> to vector<8x1xf32>
    %30 = vector.extract_strided_slice %23 {offsets = [1, 0], sizes = [1, 128], strides = [1, 1]} : vector<20x128xf32> to vector<1x128xf32>
    %31 = vector.broadcast %29 : vector<8x1xf32> to vector<8x128xf32>
    %32 = vector.broadcast %30 : vector<1x128xf32> to vector<8x128xf32>
    %33 = arith.mulf %31, %32 : vector<8x128xf32>
    %34 = arith.maximumf %28, %33 : vector<8x128xf32>
    %35 = vector.extract_strided_slice %22 {offsets = [0, 2], sizes = [8, 1], strides = [1, 1]} : vector<8x128xf32> to vector<8x1xf32>
    %36 = vector.extract_strided_slice %23 {offsets = [2, 0], sizes = [1, 128], strides = [1, 1]} : vector<20x128xf32> to vector<1x128xf32>
    %37 = vector.broadcast %35 : vector<8x1xf32> to vector<8x128xf32>
    %38 = vector.broadcast %36 : vector<1x128xf32> to vector<8x128xf32>
    %39 = arith.mulf %37, %38 : vector<8x128xf32>
    %40 = arith.maximumf %34, %39 : vector<8x128xf32>
    %41 = vector.extract_strided_slice %22 {offsets = [0, 3], sizes = [8, 1], strides = [1, 1]} : vector<8x128xf32> to vector<8x1xf32>
    %42 = vector.extract_strided_slice %23 {offsets = [3, 0], sizes = [1, 128], strides = [1, 1]} : vector<20x128xf32> to vector<1x128xf32>
    %43 = vector.broadcast %41 : vector<8x1xf32> to vector<8x128xf32>
    %44 = vector.broadcast %42 : vector<1x128xf32> to vector<8x128xf32>
    %45 = arith.mulf %43, %44 : vector<8x128xf32>
    %46 = arith.maximumf %40, %45 : vector<8x128xf32>
    %47 = vector.extract_strided_slice %22 {offsets = [0, 4], sizes = [8, 1], strides = [1, 1]} : vector<8x128xf32> to vector<8x1xf32>
    %48 = vector.extract_strided_slice %23 {offsets = [4, 0], sizes = [1, 128], strides = [1, 1]} : vector<20x128xf32> to vector<1x128xf32>
    %49 = vector.broadcast %47 : vector<8x1xf32> to vector<8x128xf32>
    %50 = vector.broadcast %48 : vector<1x128xf32> to vector<8x128xf32>
    %51 = arith.mulf %49, %50 : vector<8x128xf32>
    %52 = arith.maximumf %46, %51 : vector<8x128xf32>
    %53 = vector.extract_strided_slice %22 {offsets = [0, 5], sizes = [8, 1], strides = [1, 1]} : vector<8x128xf32> to vector<8x1xf32>
    %54 = vector.extract_strided_slice %23 {offsets = [5, 0], sizes = [1, 128], strides = [1, 1]} : vector<20x128xf32> to vector<1x128xf32>
    %55 = vector.broadcast %53 : vector<8x1xf32> to vector<8x128xf32>
    %56 = vector.broadcast %54 : vector<1x128xf32> to vector<8x128xf32>
    %57 = arith.mulf %55, %56 : vector<8x128xf32>
    %58 = arith.maximumf %52, %57 : vector<8x128xf32>
    %59 = vector.extract_strided_slice %22 {offsets = [0, 6], sizes = [8, 1], strides = [1, 1]} : vector<8x128xf32> to vector<8x1xf32>
    %60 = vector.extract_strided_slice %23 {offsets = [6, 0], sizes = [1, 128], strides = [1, 1]} : vector<20x128xf32> to vector<1x128xf32>
    %61 = vector.broadcast %59 : vector<8x1xf32> to vector<8x128xf32>
    %62 = vector.broadcast %60 : vector<1x128xf32> to vector<8x128xf32>
    %63 = arith.mulf %61, %62 : vector<8x128xf32>
    %64 = arith.maximumf %58, %63 : vector<8x128xf32>
    %65 = vector.extract_strided_slice %22 {offsets = [0, 7], sizes = [8, 1], strides = [1, 1]} : vector<8x128xf32> to vector<8x1xf32>
    %66 = vector.extract_strided_slice %23 {offsets = [7, 0], sizes = [1, 128], strides = [1, 1]} : vector<20x128xf32> to vector<1x128xf32>
    %67 = vector.broadcast %65 : vector<8x1xf32> to vector<8x128xf32>
    %68 = vector.broadcast %66 : vector<1x128xf32> to vector<8x128xf32>
    %69 = arith.mulf %67, %68 : vector<8x128xf32>
    %70 = arith.maximumf %64, %69 : vector<8x128xf32>
    %71 = vector.extract_strided_slice %22 {offsets = [0, 8], sizes = [8, 1], strides = [1, 1]} : vector<8x128xf32> to vector<8x1xf32>
    %72 = vector.extract_strided_slice %23 {offsets = [8, 0], sizes = [1, 128], strides = [1, 1]} : vector<20x128xf32> to vector<1x128xf32>
    %73 = vector.broadcast %71 : vector<8x1xf32> to vector<8x128xf32>
    %74 = vector.broadcast %72 : vector<1x128xf32> to vector<8x128xf32>
    %75 = arith.mulf %73, %74 : vector<8x128xf32>
    %76 = arith.maximumf %70, %75 : vector<8x128xf32>
    %77 = vector.extract_strided_slice %22 {offsets = [0, 9], sizes = [8, 1], strides = [1, 1]} : vector<8x128xf32> to vector<8x1xf32>
    %78 = vector.extract_strided_slice %23 {offsets = [9, 0], sizes = [1, 128], strides = [1, 1]} : vector<20x128xf32> to vector<1x128xf32>
    %79 = vector.broadcast %77 : vector<8x1xf32> to vector<8x128xf32>
    %80 = vector.broadcast %78 : vector<1x128xf32> to vector<8x128xf32>
    %81 = arith.mulf %79, %80 : vector<8x128xf32>
    %82 = arith.maximumf %76, %81 : vector<8x128xf32>
    %83 = vector.extract_strided_slice %22 {offsets = [0, 10], sizes = [8, 1], strides = [1, 1]} : vector<8x128xf32> to vector<8x1xf32>
    %84 = vector.extract_strided_slice %23 {offsets = [10, 0], sizes = [1, 128], strides = [1, 1]} : vector<20x128xf32> to vector<1x128xf32>
    %85 = vector.broadcast %83 : vector<8x1xf32> to vector<8x128xf32>
    %86 = vector.broadcast %84 : vector<1x128xf32> to vector<8x128xf32>
    %87 = arith.mulf %85, %86 : vector<8x128xf32>
    %88 = arith.maximumf %82, %87 : vector<8x128xf32>
    %89 = vector.extract_strided_slice %22 {offsets = [0, 11], sizes = [8, 1], strides = [1, 1]} : vector<8x128xf32> to vector<8x1xf32>
    %90 = vector.extract_strided_slice %23 {offsets = [11, 0], sizes = [1, 128], strides = [1, 1]} : vector<20x128xf32> to vector<1x128xf32>
    %91 = vector.broadcast %89 : vector<8x1xf32> to vector<8x128xf32>
    %92 = vector.broadcast %90 : vector<1x128xf32> to vector<8x128xf32>
    %93 = arith.mulf %91, %92 : vector<8x128xf32>
    %94 = arith.maximumf %88, %93 : vector<8x128xf32>
    %95 = vector.extract_strided_slice %22 {offsets = [0, 12], sizes = [8, 1], strides = [1, 1]} : vector<8x128xf32> to vector<8x1xf32>
    %96 = vector.extract_strided_slice %23 {offsets = [12, 0], sizes = [1, 128], strides = [1, 1]} : vector<20x128xf32> to vector<1x128xf32>
    %97 = vector.broadcast %95 : vector<8x1xf32> to vector<8x128xf32>
    %98 = vector.broadcast %96 : vector<1x128xf32> to vector<8x128xf32>
    %99 = arith.mulf %97, %98 : vector<8x128xf32>
    %100 = arith.maximumf %94, %99 : vector<8x128xf32>
    %101 = vector.extract_strided_slice %22 {offsets = [0, 13], sizes = [8, 1], strides = [1, 1]} : vector<8x128xf32> to vector<8x1xf32>
    %102 = vector.extract_strided_slice %23 {offsets = [13, 0], sizes = [1, 128], strides = [1, 1]} : vector<20x128xf32> to vector<1x128xf32>
    %103 = vector.broadcast %101 : vector<8x1xf32> to vector<8x128xf32>
    %104 = vector.broadcast %102 : vector<1x128xf32> to vector<8x128xf32>
    %105 = arith.mulf %103, %104 : vector<8x128xf32>
    %106 = arith.maximumf %100, %105 : vector<8x128xf32>
    %107 = vector.extract_strided_slice %22 {offsets = [0, 14], sizes = [8, 1], strides = [1, 1]} : vector<8x128xf32> to vector<8x1xf32>
    %108 = vector.extract_strided_slice %23 {offsets = [14, 0], sizes = [1, 128], strides = [1, 1]} : vector<20x128xf32> to vector<1x128xf32>
    %109 = vector.broadcast %107 : vector<8x1xf32> to vector<8x128xf32>
    %110 = vector.broadcast %108 : vector<1x128xf32> to vector<8x128xf32>
    %111 = arith.mulf %109, %110 : vector<8x128xf32>
    %112 = arith.maximumf %106, %111 : vector<8x128xf32>
    %113 = vector.extract_strided_slice %22 {offsets = [0, 15], sizes = [8, 1], strides = [1, 1]} : vector<8x128xf32> to vector<8x1xf32>
    %114 = vector.extract_strided_slice %23 {offsets = [15, 0], sizes = [1, 128], strides = [1, 1]} : vector<20x128xf32> to vector<1x128xf32>
    %115 = vector.broadcast %113 : vector<8x1xf32> to vector<8x128xf32>
    %116 = vector.broadcast %114 : vector<1x128xf32> to vector<8x128xf32>
    %117 = arith.mulf %115, %116 : vector<8x128xf32>
    %118 = arith.maximumf %112, %117 : vector<8x128xf32>
    %119 = vector.extract_strided_slice %22 {offsets = [0, 16], sizes = [8, 1], strides = [1, 1]} : vector<8x128xf32> to vector<8x1xf32>
    %120 = vector.extract_strided_slice %23 {offsets = [16, 0], sizes = [1, 128], strides = [1, 1]} : vector<20x128xf32> to vector<1x128xf32>
    %121 = vector.broadcast %119 : vector<8x1xf32> to vector<8x128xf32>
    %122 = vector.broadcast %120 : vector<1x128xf32> to vector<8x128xf32>
    %123 = arith.mulf %121, %122 : vector<8x128xf32>
    %124 = arith.maximumf %118, %123 : vector<8x128xf32>
    %125 = vector.extract_strided_slice %22 {offsets = [0, 17], sizes = [8, 1], strides = [1, 1]} : vector<8x128xf32> to vector<8x1xf32>
    %126 = vector.extract_strided_slice %23 {offsets = [17, 0], sizes = [1, 128], strides = [1, 1]} : vector<20x128xf32> to vector<1x128xf32>
    %127 = vector.broadcast %125 : vector<8x1xf32> to vector<8x128xf32>
    %128 = vector.broadcast %126 : vector<1x128xf32> to vector<8x128xf32>
    %129 = arith.mulf %127, %128 : vector<8x128xf32>
    %130 = arith.maximumf %124, %129 : vector<8x128xf32>
    %131 = vector.extract_strided_slice %22 {offsets = [0, 18], sizes = [8, 1], strides = [1, 1]} : vector<8x128xf32> to vector<8x1xf32>
    %132 = vector.extract_strided_slice %23 {offsets = [18, 0], sizes = [1, 128], strides = [1, 1]} : vector<20x128xf32> to vector<1x128xf32>
    %133 = vector.broadcast %131 : vector<8x1xf32> to vector<8x128xf32>
    %134 = vector.broadcast %132 : vector<1x128xf32> to vector<8x128xf32>
    %135 = arith.mulf %133, %134 : vector<8x128xf32>
    %136 = arith.maximumf %130, %135 : vector<8x128xf32>
    %137 = vector.extract_strided_slice %22 {offsets = [0, 19], sizes = [8, 1], strides = [1, 1]} : vector<8x128xf32> to vector<8x1xf32>
    %138 = vector.extract_strided_slice %23 {offsets = [19, 0], sizes = [1, 128], strides = [1, 1]} : vector<20x128xf32> to vector<1x128xf32>
    %139 = vector.broadcast %137 : vector<8x1xf32> to vector<8x128xf32>
    %140 = vector.broadcast %138 : vector<1x128xf32> to vector<8x128xf32>
    %141 = arith.mulf %139, %140 : vector<8x128xf32>
    %142 = arith.maximumf %136, %141 : vector<8x128xf32>
    %c0_19 = arith.constant 0 : index
    %c0_20 = arith.constant 0 : index
    %143 = vector.load %arg9[%c0_19, %c0_20] : memref<8x128xf32, #tpu.memory_space<vmem>>, vector<8x128xf32>
    tpu.vector_store %arg9[%c0_19, %c0_20], %142 {strides = array<i32>} : memref<8x128xf32, #tpu.memory_space<vmem>>, vector<8x128xf32>,
    return
  }
  func.func @transform_0(%arg0: i32) -> (i32, i32) {
    %c0_i32 = arith.constant 0 : i32
    %c0_i32_0 = arith.constant 0 : i32
    return %arg0, %c0_i32 : i32, i32
  }
  func.func @transform_1(%arg0: i32) -> (i32, i32) {
    %c0_i32 = arith.constant 0 : i32
    %c0_i32_0 = arith.constant 0 : i32
    %c0_i32_1 = arith.constant 0 : i32
    return %c0_i32, %c0_i32_0 : i32, i32
  }
  func.func @transform_2(%arg0: i32) -> (i32, i32) {
    %c0_i32 = arith.constant 0 : i32
    %c0_i32_0 = arith.constant 0 : i32
    %c0_i32_1 = arith.constant 0 : i32
    return %c0_i32, %c0_i32_0 : i32, i32
  }
  func.func @transform_3(%arg0: i32) -> (i32, i32) {
    %c0_i32 = arith.constant 0 : i32
    %c0_i32_0 = arith.constant 0 : i32
    %c0_i32_1 = arith.constant 0 : i32
    return %c0_i32, %c0_i32_0 : i32, i32
  }
  func.func @transform_4(%arg0: i32) -> (i32, i32) {
    %c0_i32 = arith.constant 0 : i32
    %c0_i32_0 = arith.constant 0 : i32
    %c0_i32_1 = arith.constant 0 : i32
    return %c0_i32, %c0_i32_0 : i32, i32
  }
  func.func @transform_5(%arg0: i32) -> (i32, i32) {
    %c0_i32 = arith.constant 0 : i32
    %c0_i32_0 = arith.constant 0 : i32
    %c0_i32_1 = arith.constant 0 : i32
    return %c0_i32, %c0_i32_0 : i32, i32
  }
  func.func @transform_6(%arg0: i32) -> (i32, i32) {
    %c0_i32 = arith.constant 0 : i32
    %c0_i32_0 = arith.constant 0 : i32
    %c0_i32_1 = arith.constant 0 : i32
    return %c0_i32, %c0_i32_0 : i32, i32
  }
  func.func @transform_7(%arg0: i32) -> (i32, i32) {
    %c0_i32 = arith.constant 0 : i32
    %c0_i32_0 = arith.constant 0 : i32
    %c0_i32_1 = arith.constant 0 : i32
    return %c0_i32, %c0_i32_0 : i32, i32
  }
  func.func @transform_8(%arg0: i32) -> (i32, i32) {
    %c0_i32 = arith.constant 0 : i32
    %c0_i32_0 = arith.constant 0 : i32
    return %arg0, %c0_i32 : i32, i32
  }
}

</mosaic_0001>

<llo_original>
// kernel: tpu_custom_call.1
$region0: #{tpu_custom_call.1}
  #allocation0 [shape = 'u32[]', space=smem, size = 0x4, offset = 0x4, fixed_abs, tag = 'smem constant byte address 0x4 - core index']
  #allocation1 [shape = 'u32[144,128]{1,0:T(1,128)}', space=vmem, size = 0x12000, scoped, tag = 'internal scratch']
  %s0 = inlined_call_operand.hbm [shape: f32[2,784], index: 0, kind: input, shape index: {}]
  %s1 = inlined_call_operand.hbm [shape: bf16[784,256], index: 1, kind: input, shape index: {}]
  %s2 = inlined_call_operand.vmem [shape: f32[1,256], index: 2, kind: input, shape index: {}]
  %s3 = inlined_call_operand.hbm [shape: bf16[256,256], index: 3, kind: input, shape index: {}]
  %s4 = inlined_call_operand.hbm [shape: f32[1,256], index: 4, kind: input, shape index: {}]
  %s5 = inlined_call_operand.hbm [shape: bf16[256,128], index: 5, kind: input, shape index: {}]
  %s6 = inlined_call_operand.hbm [shape: f32[1,128], index: 6, kind: input, shape index: {}]
  %s7 = inlined_call_operand.vmem [shape: f32[20,128], index: 7, kind: input, shape index: {}]
  %s8 = inlined_call_operand.hbm [shape: f32[2,128], index: 8, kind: output, shape index: {}]
  %s9 = sld [smem:[#allocation0]]
  $region66: #{tpu_custom_call.1} parent=0
    _
  %s11 = ssub.s32 1, %s9
  %s12 = scalar_select 0, %s11, %s9
  $region1: #{tpu_custom_call.1} parent=0
    #allocation2 [shape = 'u8[28672]{0}', space=vmem, size = 0x7000, scoped, tag = 'input window, operand 0, single buffered']
    #allocation3 [shape = 's32[1]{0}', space=sflag, size = 0x4, scoped, tag = 'scoped memory for tpu_custom_call.1']
    #allocation4 [shape = 's32[1]{0}', space=sflag, size = 0x4, scoped, tag = 'scoped memory for tpu_custom_call.1']
    #allocation5 [shape = 'u8[401408]{0}', space=vmem, size = 0x62000, scoped, tag = 'input window, operand 1, single buffered']
    #allocation6 [shape = 's32[1]{0}', space=sflag, size = 0x4, scoped, tag = 'scoped memory for tpu_custom_call.1']
    #allocation7 [shape = 'u8[131072]{0}', space=vmem, size = 0x20000, scoped, tag = 'input window, operand 3, single buffered']
    #allocation8 [shape = 'u8[1024]{0}', space=vmem, size = 0x400, scoped, tag = 'input window, operand 4, single buffered']
    #allocation9 [shape = 's32[1]{0}', space=sflag, size = 0x4, scoped, tag = 'scoped memory for tpu_custom_call.1']
    #allocation10 [shape = 'u8[65536]{0}', space=vmem, size = 0x10000, scoped, tag = 'input window, operand 5, single buffered']
    #allocation11 [shape = 'u8[512]{0}', space=vmem, size = 0x400, scoped, tag = 'input window, operand 6, single buffered']
    #allocation12 [shape = 's32[1]{0}', space=sflag, size = 0x4, scoped, tag = 'scoped memory for tpu_custom_call.1']
    #allocation13 [shape = 'u8[4096]{0}', space=vmem, size = 0x1000, scoped, tag = 'output window, operand 0, single buffered']
    %13 = vsyncpa [#allocation3], 0
    %14 = vsyncpa [#allocation6], 0
    %15 = vsyncpa [#allocation9], 0
    %16 = vsyncpa [#allocation12], 0
    %17 = vsyncpa [#allocation4], 0
    // Predicated region
    $region2: #{tpu_custom_call.1} parent=1 // pred_check
      _
    $region3: #{tpu_custom_call.1} parent=1 // pred_check_branch
      %19 = sbr.rel (0) target = $region5
    $region4: #{tpu_custom_call.1} parent=1 // pred_region
      %s21 = ssub.s32 896, 224
      %22 = vsyncadd [#allocation3], %s21
      %s23 = sshll.u32 [#allocation2], 4
      %s24 = int_to_ptr.vmem [resolvable:$true] %s23
      %29 = dma.hbm_to_vmem [thread:$0]  %s0, 224, %s24, [#allocation3], 224, 224, 14
    $region5: #{tpu_custom_call.1} parent=1 // pred_fallthru
      _
    // Predicated region
    $region6: #{tpu_custom_call.1} parent=1 // pred_check
      _
    $region7: #{tpu_custom_call.1} parent=1 // pred_check_branch
      %31 = sbr.rel (0) target = $region9
    $region8: #{tpu_custom_call.1} parent=1 // pred_region
      %s33 = ssub.s32 12544, 12544
      %34 = vsyncadd [#allocation6], %s33
      %s35 = sshll.u32 [#allocation5], 4
      %s36 = int_to_ptr.vmem [resolvable:$true] %s35
      %41 = dma.hbm_to_vmem [thread:$0]  %s1, 12544, %s36, [#allocation6], 128, 128, 8
    $region9: #{tpu_custom_call.1} parent=1 // pred_fallthru
      _
    // Predicated region
    $region10: #{tpu_custom_call.1} parent=1 // pred_check
      _
    $region11: #{tpu_custom_call.1} parent=1 // pred_check_branch
      %43 = sbr.rel (0) target = $region13
    $region12: #{tpu_custom_call.1} parent=1 // pred_region
      _
    $region13: #{tpu_custom_call.1} parent=1 // pred_fallthru
      _
    // Predicated region
    $region14: #{tpu_custom_call.1} parent=1 // pred_check
      _
    $region15: #{tpu_custom_call.1} parent=1 // pred_check_branch
      %45 = sbr.rel (0) target = $region17
    $region16: #{tpu_custom_call.1} parent=1 // pred_region
      %s47 = ssub.s32 4096, 4096
      %48 = vsyncadd [#allocation6], %s47
      %s49 = sshll.u32 [#allocation7], 4
      %s50 = int_to_ptr.vmem [resolvable:$true] %s49
      %55 = dma.hbm_to_vmem [thread:$0]  %s3, 4096, %s50, [#allocation6], 128, 128, 8
    $region17: #{tpu_custom_call.1} parent=1 // pred_fallthru
      _
    // Predicated region
    $region18: #{tpu_custom_call.1} parent=1 // pred_check
      _
    $region19: #{tpu_custom_call.1} parent=1 // pred_check_branch
      %57 = sbr.rel (0) target = $region21
    $region20: #{tpu_custom_call.1} parent=1 // pred_region
      %s59 = ssub.s32 32, 32
      %60 = vsyncadd [#allocation9], %s59
      %s62 = sshll.u32 [#allocation8], 4
      %s63 = int_to_ptr.vmem [resolvable:$true] %s62
      %65 = dma.hbm_to_vmem [thread:$0]  %s4, 32, %s63, [#allocation9]
    $region21: #{tpu_custom_call.1} parent=1 // pred_fallthru
      _
    // Predicated region
    $region22: #{tpu_custom_call.1} parent=1 // pred_check
      _
    $region23: #{tpu_custom_call.1} parent=1 // pred_check_branch
      %67 = sbr.rel (0) target = $region25
    $region24: #{tpu_custom_call.1} parent=1 // pred_region
      %s69 = ssub.s32 2048, 2048
      %70 = vsyncadd [#allocation9], %s69
      %s71 = sshll.u32 [#allocation10], 4
      %s72 = int_to_ptr.vmem [resolvable:$true] %s71
      %77 = dma.hbm_to_vmem [thread:$0]  %s5, 2048, %s72, [#allocation9], 64, 64, 4
    $region25: #{tpu_custom_call.1} parent=1 // pred_fallthru
      _
    // Predicated region
    $region26: #{tpu_custom_call.1} parent=1 // pred_check
      _
    $region27: #{tpu_custom_call.1} parent=1 // pred_check_branch
      %79 = sbr.rel (0) target = $region29
    $region28: #{tpu_custom_call.1} parent=1 // pred_region
      %s81 = ssub.s32 16, 16
      %82 = vsyncadd [#allocation12], %s81
      %s84 = sshll.u32 [#allocation11], 4
      %s85 = int_to_ptr.vmem [resolvable:$true] %s84
      %87 = dma.hbm_to_vmem [thread:$0]  %s6, 16, %s85, [#allocation12]
    $region29: #{tpu_custom_call.1} parent=1 // pred_fallthru
      _
    // Predicated region
    $region30: #{tpu_custom_call.1} parent=1 // pred_check
      _
    $region31: #{tpu_custom_call.1} parent=1 // pred_check_branch
      %89 = sbr.rel (0) target = $region33
    $region32: #{tpu_custom_call.1} parent=1 // pred_region
      _
    $region33: #{tpu_custom_call.1} parent=1 // pred_fallthru
      _
    // Predicated region
    $region34: #{tpu_custom_call.1} parent=1 // pred_check
      _
    $region35: #{tpu_custom_call.1} parent=1 // pred_check_branch
      %91 = sbr.rel (0) target = $region37
    $region36: #{tpu_custom_call.1} parent=1 // pred_region
      %92 = dma.done [#allocation3], 896
    $region37: #{tpu_custom_call.1} parent=1 // pred_fallthru
      _
    // Predicated region
    $region38: #{tpu_custom_call.1} parent=1 // pred_check
      _
    $region39: #{tpu_custom_call.1} parent=1 // pred_check_branch
      %94 = sbr.rel (0) target = $region41
    $region40: #{tpu_custom_call.1} parent=1 // pred_region
      %95 = dma.done [#allocation6], 12544
    $region41: #{tpu_custom_call.1} parent=1 // pred_fallthru
      _
    // Predicated region
    $region42: #{tpu_custom_call.1} parent=1 // pred_check
      _
    $region43: #{tpu_custom_call.1} parent=1 // pred_check_branch
      %97 = sbr.rel (0) target = $region45
    $region44: #{tpu_custom_call.1} parent=1 // pred_region
      %98 = dma.done [#allocation6], 4096
    $region45: #{tpu_custom_call.1} parent=1 // pred_fallthru
      _
    // Predicated region
    $region46: #{tpu_custom_call.1} parent=1 // pred_check
      _
    $region47: #{tpu_custom_call.1} parent=1 // pred_check_branch
      %100 = sbr.rel (0) target = $region49
    $region48: #{tpu_custom_call.1} parent=1 // pred_region
      %101 = dma.done [#allocation9], 32
    $region49: #{tpu_custom_call.1} parent=1 // pred_fallthru
      _
    // Predicated region
    $region50: #{tpu_custom_call.1} parent=1 // pred_check
      _
    $region51: #{tpu_custom_call.1} parent=1 // pred_check_branch
      %103 = sbr.rel (0) target = $region53
    $region52: #{tpu_custom_call.1} parent=1 // pred_region
      %104 = dma.done [#allocation9], 2048
    $region53: #{tpu_custom_call.1} parent=1 // pred_fallthru
      _
    // Predicated region
    $region54: #{tpu_custom_call.1} parent=1 // pred_check
      _
    $region55: #{tpu_custom_call.1} parent=1 // pred_check_branch
      %106 = sbr.rel (0) target = $region57
    $region56: #{tpu_custom_call.1} parent=1 // pred_region
      %107 = dma.done [#allocation12], 16
    $region57: #{tpu_custom_call.1} parent=1 // pred_fallthru
      _
    %v109 = vld [vmem:[#allocation2] sm:$0xff]
    %v110 = vld [vmem:[#allocation2 + $0x8] sm:$0x3f]
    %v111 = vld [vmem:[#allocation2 + $0xe] sm:$0xff]
    %v112 = vld [vmem:[#allocation2 + $0x16] sm:$0x3f]
    %v113 = vld [vmem:[#allocation2 + $0x1c] sm:$0xff]
    %v114 = vld [vmem:[#allocation2 + $0x24] sm:$0x3f]
    %v115 = vld [vmem:[#allocation2 + $0x2a] sm:$0xff]
    %v116 = vld [vmem:[#allocation2 + $0x32] sm:$0x3f]
    %v125 = vcombine.low %v109, %v111
    %v126 = vcombine.high %v109, %v111
    %v127 = vcombine.low %v113, %v115
    %v128 = vcombine.high %v113, %v115
    %v130 = vunpack.c.l.s4 1983009808
    %v131 = vunpack.c.0.s8 %v130
    %v132 = vlaneseq
    %v133 = vshrl.u32 %v132, 7
    %v134 = vsub.s32 %v131, %v133
    %v135 = vrot.slane %v125, %v134
    %v137 = vunpack.c.l.s4 1983009808
    %v138 = vunpack.c.0.s8 %v137
    %v139 = vlaneseq
    %v140 = vshrl.u32 %v139, 7
    %v141 = vsub.s32 %v138, %v140
    %v142 = vrot.slane %v126, %v141
    %v144 = vunpack.c.l.s4 1983009808
    %v145 = vunpack.c.0.s8 %v144
    %v146 = vlaneseq
    %v147 = vshrl.u32 %v146, 7
    %v148 = vsub.s32 %v145, %v147
    %v149 = vrot.slane %v127, %v148
    %v151 = vunpack.c.l.s4 1983009808
    %v152 = vunpack.c.0.s8 %v151
    %v153 = vlaneseq
    %v154 = vshrl.u32 %v153, 7
    %v155 = vsub.s32 %v152, %v154
    %v156 = vrot.slane %v128, %v155
    %v157 = vcombine.low %v135, %v149
    %v158 = vcombine.high %v135, %v149
    %v159 = vcombine.low %v142, %v156
    %v160 = vcombine.high %v142, %v156
    %v161 = vcombine.low %v110, %v112
    %v162 = vcombine.high %v110, %v112
    %v163 = vcombine.low %v114, %v116
    %v164 = vcombine.high %v114, %v116
    %v166 = vunpack.c.l.s4 1983009808
    %v167 = vunpack.c.0.s8 %v166
    %v168 = vlaneseq
    %v169 = vshrl.u32 %v168, 7
    %v170 = vsub.s32 %v167, %v169
    %v171 = vrot.slane %v161, %v170
    %v173 = vunpack.c.l.s4 1983009808
    %v174 = vunpack.c.0.s8 %v173
    %v175 = vlaneseq
    %v176 = vshrl.u32 %v175, 7
    %v177 = vsub.s32 %v174, %v176
    %v178 = vrot.slane %v162, %v177
    %v180 = vunpack.c.l.s4 1983009808
    %v181 = vunpack.c.0.s8 %v180
    %v182 = vlaneseq
    %v183 = vshrl.u32 %v182, 7
    %v184 = vsub.s32 %v181, %v183
    %v185 = vrot.slane %v163, %v184
    %v187 = vunpack.c.l.s4 1983009808
    %v188 = vunpack.c.0.s8 %v187
    %v189 = vlaneseq
    %v190 = vshrl.u32 %v189, 7
    %v191 = vsub.s32 %v188, %v190
    %v192 = vrot.slane %v164, %v191
    %v193 = vcombine.low %v171, %v185
    %v194 = vcombine.high %v171, %v185
    %v195 = vcombine.low %v178, %v192
    %v203 = vpack.c.bf16 %v157, %v157
    %v204 = vpack.c.bf16 %v158, %v158
    %v205 = vpack.c.bf16 %v159, %v159
    %v206 = vpack.c.bf16 %v160, %v160
    %v207 = vpack.c.bf16 %v193, %v193
    %v208 = vpack.c.bf16 %v194, %v194
    %v209 = vpack.c.bf16 %v195, %v195
    %v210 = vld [vmem:[#allocation5] sm:$0xff]
    %v211 = vld [vmem:[#allocation5 + $0x8] sm:$0xff]
    %v212 = vld [vmem:[#allocation5 + $0x10] sm:$0xff]
    %v213 = vld [vmem:[#allocation5 + $0x18] sm:$0xff]
    %v214 = vld [vmem:[#allocation5 + $0x20] sm:$0xff]
    %v215 = vld [vmem:[#allocation5 + $0x28] sm:$0xff]
    %v216 = vld [vmem:[#allocation5 + $0x30] sm:$0xff]
    %v217 = vld [vmem:[#allocation5 + $0x38] sm:$0xff]
    %v218 = vld [vmem:[#allocation5 + $0x40] sm:$0xff]
    %v219 = vld [vmem:[#allocation5 + $0x48] sm:$0xff]
    %v220 = vld [vmem:[#allocation5 + $0x50] sm:$0xff]
    %v221 = vld [vmem:[#allocation5 + $0x58] sm:$0xff]
    %v222 = vld [vmem:[#allocation5 + $0x60] sm:$0xff]
    %v223 = vld [vmem:[#allocation5 + $0x68] sm:$0xff]
    %v224 = vld [vmem:[#allocation5 + $0x70] sm:$0xff]
    %v225 = vld [vmem:[#allocation5 + $0x78] sm:$0xff]
    %v226 = vld [vmem:[#allocation5 + $0x80] sm:$0xff]
    %v227 = vld [vmem:[#allocation5 + $0x88] sm:$0xff]
    %v228 = vld [vmem:[#allocation5 + $0x90] sm:$0xff]
    %v229 = vld [vmem:[#allocation5 + $0x98] sm:$0xff]
    %v230 = vld [vmem:[#allocation5 + $0xa0] sm:$0xff]
    %v231 = vld [vmem:[#allocation5 + $0xa8] sm:$0xff]
    %v232 = vld [vmem:[#allocation5 + $0xb0] sm:$0xff]
    %v233 = vld [vmem:[#allocation5 + $0xb8] sm:$0xff]
    %v234 = vld [vmem:[#allocation5 + $0xc0] sm:$0xff]
    %v235 = vld [vmem:[#allocation5 + $0xc8] sm:$0xff]
    %v236 = vld [vmem:[#allocation5 + $0xd0] sm:$0xff]
    %v237 = vld [vmem:[#allocation5 + $0xd8] sm:$0xff]
    %v238 = vld [vmem:[#allocation5 + $0xe0] sm:$0xff]
    %v239 = vld [vmem:[#allocation5 + $0xe8] sm:$0xff]
    %v240 = vld [vmem:[#allocation5 + $0xf0] sm:$0xff]
    %v241 = vld [vmem:[#allocation5 + $0xf8] sm:$0xff]
    %v242 = vld [vmem:[#allocation5 + $0x100] sm:$0xff]
    %v243 = vld [vmem:[#allocation5 + $0x108] sm:$0xff]
    %v244 = vld [vmem:[#allocation5 + $0x110] sm:$0xff]
    %v245 = vld [vmem:[#allocation5 + $0x118] sm:$0xff]
    %v246 = vld [vmem:[#allocation5 + $0x120] sm:$0xff]
    %v247 = vld [vmem:[#allocation5 + $0x128] sm:$0xff]
    %v248 = vld [vmem:[#allocation5 + $0x130] sm:$0xff]
    %v249 = vld [vmem:[#allocation5 + $0x138] sm:$0xff]
    %v250 = vld [vmem:[#allocation5 + $0x140] sm:$0xff]
    %v251 = vld [vmem:[#allocation5 + $0x148] sm:$0xff]
    %v252 = vld [vmem:[#allocation5 + $0x150] sm:$0xff]
    %v253 = vld [vmem:[#allocation5 + $0x158] sm:$0xff]
    %v254 = vld [vmem:[#allocation5 + $0x160] sm:$0xff]
    %v255 = vld [vmem:[#allocation5 + $0x168] sm:$0xff]
    %v256 = vld [vmem:[#allocation5 + $0x170] sm:$0xff]
    %v257 = vld [vmem:[#allocation5 + $0x178] sm:$0xff]
    %v258 = vld [vmem:[#allocation5 + $0x180] sm:$0xff]
    %v259 = vld [vmem:[#allocation5 + $0x188] sm:$0xff]
    %v260 = vld [vmem:[#allocation5 + $0x190] sm:$0xff]
    %v261 = vld [vmem:[#allocation5 + $0x198] sm:$0xff]
    %v262 = vld [vmem:[#allocation5 + $0x1a0] sm:$0xff]
    %v263 = vld [vmem:[#allocation5 + $0x1a8] sm:$0xff]
    %v264 = vld [vmem:[#allocation5 + $0x1b0] sm:$0xff]
    %v265 = vld [vmem:[#allocation5 + $0x1b8] sm:$0xff]
    %v266 = vld [vmem:[#allocation5 + $0x1c0] sm:$0xff]
    %v267 = vld [vmem:[#allocation5 + $0x1c8] sm:$0xff]
    %v268 = vld [vmem:[#allocation5 + $0x1d0] sm:$0xff]
    %v269 = vld [vmem:[#allocation5 + $0x1d8] sm:$0xff]
    %v270 = vld [vmem:[#allocation5 + $0x1e0] sm:$0xff]
    %v271 = vld [vmem:[#allocation5 + $0x1e8] sm:$0xff]
    %v272 = vld [vmem:[#allocation5 + $0x1f0] sm:$0xff]
    %v273 = vld [vmem:[#allocation5 + $0x1f8] sm:$0xff]
    %v274 = vld [vmem:[#allocation5 + $0x200] sm:$0xff]
    %v275 = vld [vmem:[#allocation5 + $0x208] sm:$0xff]
    %v276 = vld [vmem:[#allocation5 + $0x210] sm:$0xff]
    %v277 = vld [vmem:[#allocation5 + $0x218] sm:$0xff]
    %v278 = vld [vmem:[#allocation5 + $0x220] sm:$0xff]
    %v279 = vld [vmem:[#allocation5 + $0x228] sm:$0xff]
    %v280 = vld [vmem:[#allocation5 + $0x230] sm:$0xff]
    %v281 = vld [vmem:[#allocation5 + $0x238] sm:$0xff]
    %v282 = vld [vmem:[#allocation5 + $0x240] sm:$0xff]
    %v283 = vld [vmem:[#allocation5 + $0x248] sm:$0xff]
    %v284 = vld [vmem:[#allocation5 + $0x250] sm:$0xff]
    %v285 = vld [vmem:[#allocation5 + $0x258] sm:$0xff]
    %v286 = vld [vmem:[#allocation5 + $0x260] sm:$0xff]
    %v287 = vld [vmem:[#allocation5 + $0x268] sm:$0xff]
    %v288 = vld [vmem:[#allocation5 + $0x270] sm:$0xff]
    %v289 = vld [vmem:[#allocation5 + $0x278] sm:$0xff]
    %v290 = vld [vmem:[#allocation5 + $0x280] sm:$0xff]
    %v291 = vld [vmem:[#allocation5 + $0x288] sm:$0xff]
    %v292 = vld [vmem:[#allocation5 + $0x290] sm:$0xff]
    %v293 = vld [vmem:[#allocation5 + $0x298] sm:$0xff]
    %v294 = vld [vmem:[#allocation5 + $0x2a0] sm:$0xff]
    %v295 = vld [vmem:[#allocation5 + $0x2a8] sm:$0xff]
    %v296 = vld [vmem:[#allocation5 + $0x2b0] sm:$0xff]
    %v297 = vld [vmem:[#allocation5 + $0x2b8] sm:$0xff]
    %v298 = vld [vmem:[#allocation5 + $0x2c0] sm:$0xff]
    %v299 = vld [vmem:[#allocation5 + $0x2c8] sm:$0xff]
    %v300 = vld [vmem:[#allocation5 + $0x2d0] sm:$0xff]
    %v301 = vld [vmem:[#allocation5 + $0x2d8] sm:$0xff]
    %v302 = vld [vmem:[#allocation5 + $0x2e0] sm:$0xff]
    %v303 = vld [vmem:[#allocation5 + $0x2e8] sm:$0xff]
    %v304 = vld [vmem:[#allocation5 + $0x2f0] sm:$0xff]
    %v305 = vld [vmem:[#allocation5 + $0x2f8] sm:$0xff]
    %v306 = vld [vmem:[#allocation5 + $0x300] sm:$0xff]
    %v307 = vld [vmem:[#allocation5 + $0x308] sm:$0xff]
    %v308 = vld [vmem:[%s2] sm:$0x3]
    %v310 = vlaneseq
    %v311 = vshrl.u32 %v310, 7
    %v312 = vsub.s32 0, %v311
    %v313 = vrot.slane %v308, %v312
    %v314 = vlaneseq
    %v315 = vshrl.u32 %v314, 7
    %v316 = vsub.s32 1, %v315
    %v317 = vrot.slane %v308, %v316
    %v418 = vunpack.c.l.b16 %v210
    %v419 = vunpack.c.h.b16 %v210
    %v420 = vunpack.c.l.b16 %v211
    %v421 = vunpack.c.h.b16 %v211
    %v422 = vunpack.c.l.b16 %v212
    %v423 = vunpack.c.h.b16 %v212
    %v424 = vunpack.c.l.b16 %v213
    %v425 = vunpack.c.h.b16 %v213
    %v426 = vunpack.c.l.b16 %v214
    %v427 = vunpack.c.h.b16 %v214
    %v428 = vunpack.c.l.b16 %v215
    %v429 = vunpack.c.h.b16 %v215
    %v430 = vunpack.c.l.b16 %v216
    %v431 = vunpack.c.h.b16 %v216
    %v432 = vunpack.c.l.b16 %v217
    %v433 = vunpack.c.h.b16 %v217
    %v434 = vunpack.c.l.b16 %v218
    %v435 = vunpack.c.h.b16 %v218
    %v436 = vunpack.c.l.b16 %v219
    %v437 = vunpack.c.h.b16 %v219
    %v438 = vunpack.c.l.b16 %v220
    %v439 = vunpack.c.h.b16 %v220
    %v440 = vunpack.c.l.b16 %v221
    %v441 = vunpack.c.h.b16 %v221
    %v442 = vunpack.c.l.b16 %v222
    %v443 = vunpack.c.h.b16 %v222
    %v444 = vunpack.c.l.b16 %v223
    %v445 = vunpack.c.h.b16 %v223
    %v446 = vunpack.c.l.b16 %v224
    %v447 = vunpack.c.h.b16 %v224
    %v448 = vunpack.c.l.b16 %v225
    %v449 = vunpack.c.h.b16 %v225
    %v450 = vunpack.c.l.b16 %v226
    %v451 = vunpack.c.h.b16 %v226
    %v452 = vunpack.c.l.b16 %v227
    %v453 = vunpack.c.h.b16 %v227
    %v454 = vunpack.c.l.b16 %v228
    %v455 = vunpack.c.h.b16 %v228
    %v456 = vunpack.c.l.b16 %v229
    %v457 = vunpack.c.h.b16 %v229
    %v458 = vunpack.c.l.b16 %v230
    %v459 = vunpack.c.h.b16 %v230
    %v460 = vunpack.c.l.b16 %v231
    %v461 = vunpack.c.h.b16 %v231
    %v462 = vunpack.c.l.b16 %v232
    %v463 = vunpack.c.h.b16 %v232
    %v464 = vunpack.c.l.b16 %v233
    %v465 = vunpack.c.h.b16 %v233
    %v466 = vunpack.c.l.b16 %v234
    %v467 = vunpack.c.h.b16 %v234
    %v468 = vunpack.c.l.b16 %v235
    %v469 = vunpack.c.h.b16 %v235
    %v470 = vunpack.c.l.b16 %v236
    %v471 = vunpack.c.h.b16 %v236
    %v472 = vunpack.c.l.b16 %v237
    %v473 = vunpack.c.h.b16 %v237
    %v474 = vunpack.c.l.b16 %v238
    %v475 = vunpack.c.h.b16 %v238
    %v476 = vunpack.c.l.b16 %v239
    %v477 = vunpack.c.h.b16 %v239
    %v478 = vunpack.c.l.b16 %v240
    %v479 = vunpack.c.h.b16 %v240
    %v480 = vunpack.c.l.b16 %v241
    %v481 = vunpack.c.h.b16 %v241
    %v482 = vunpack.c.l.b16 %v242
    %v483 = vunpack.c.h.b16 %v242
    %v484 = vunpack.c.l.b16 %v243
    %v485 = vunpack.c.h.b16 %v243
    %v486 = vunpack.c.l.b16 %v244
    %v487 = vunpack.c.h.b16 %v244
    %v488 = vunpack.c.l.b16 %v245
    %v489 = vunpack.c.h.b16 %v245
    %v490 = vunpack.c.l.b16 %v246
    %v491 = vunpack.c.h.b16 %v246
    %v492 = vunpack.c.l.b16 %v247
    %v493 = vunpack.c.h.b16 %v247
    %v494 = vunpack.c.l.b16 %v248
    %v495 = vunpack.c.h.b16 %v248
    %v496 = vunpack.c.l.b16 %v249
    %v497 = vunpack.c.h.b16 %v249
    %v498 = vunpack.c.l.b16 %v250
    %v499 = vunpack.c.h.b16 %v250
    %v500 = vunpack.c.l.b16 %v251
    %v501 = vunpack.c.h.b16 %v251
    %v502 = vunpack.c.l.b16 %v252
    %v503 = vunpack.c.h.b16 %v252
    %v504 = vunpack.c.l.b16 %v253
    %v505 = vunpack.c.h.b16 %v253
    %v506 = vunpack.c.l.b16 %v254
    %v507 = vunpack.c.h.b16 %v254
    %v508 = vunpack.c.l.b16 %v255
    %v509 = vunpack.c.h.b16 %v255
    %v510 = vunpack.c.l.b16 %v256
    %v511 = vunpack.c.h.b16 %v256
    %v512 = vunpack.c.l.b16 %v257
    %v513 = vunpack.c.h.b16 %v257
    %v514 = vunpack.c.l.b16 %v258
    %v515 = vunpack.c.h.b16 %v258
    %v516 = vunpack.c.l.b16 %v259
    %v517 = vunpack.c.h.b16 %v259
    %v518 = vunpack.c.l.b16 %v260
    %v519 = vunpack.c.h.b16 %v260
    %v520 = vunpack.c.l.b16 %v261
    %v521 = vunpack.c.h.b16 %v261
    %v522 = vunpack.c.l.b16 %v262
    %v523 = vunpack.c.h.b16 %v262
    %v524 = vunpack.c.l.b16 %v263
    %v525 = vunpack.c.h.b16 %v263
    %v526 = vunpack.c.l.b16 %v264
    %v527 = vunpack.c.h.b16 %v264
    %v528 = vunpack.c.l.b16 %v265
    %v529 = vunpack.c.h.b16 %v265
    %v530 = vunpack.c.l.b16 %v266
    %v531 = vunpack.c.h.b16 %v266
    %v532 = vunpack.c.l.b16 %v267
    %v533 = vunpack.c.h.b16 %v267
    %v534 = vunpack.c.l.b16 %v268
    %v535 = vunpack.c.h.b16 %v268
    %v536 = vunpack.c.l.b16 %v269
    %v537 = vunpack.c.h.b16 %v269
    %v538 = vunpack.c.l.b16 %v270
    %v539 = vunpack.c.h.b16 %v270
    %v540 = vunpack.c.l.b16 %v271
    %v541 = vunpack.c.h.b16 %v271
    %v542 = vunpack.c.l.b16 %v272
    %v543 = vunpack.c.h.b16 %v272
    %v544 = vunpack.c.l.b16 %v273
    %v545 = vunpack.c.h.b16 %v273
    %v546 = vunpack.c.l.b16 %v274
    %v547 = vunpack.c.h.b16 %v274
    %v548 = vunpack.c.l.b16 %v275
    %v549 = vunpack.c.h.b16 %v275
    %v550 = vunpack.c.l.b16 %v276
    %v551 = vunpack.c.h.b16 %v276
    %v552 = vunpack.c.l.b16 %v277
    %v553 = vunpack.c.h.b16 %v277
    %v554 = vunpack.c.l.b16 %v278
    %v555 = vunpack.c.h.b16 %v278
    %v556 = vunpack.c.l.b16 %v279
    %v557 = vunpack.c.h.b16 %v279
    %v558 = vunpack.c.l.b16 %v280
    %v559 = vunpack.c.h.b16 %v280
    %v560 = vunpack.c.l.b16 %v281
    %v561 = vunpack.c.h.b16 %v281
    %v562 = vunpack.c.l.b16 %v282
    %v563 = vunpack.c.h.b16 %v282
    %v564 = vunpack.c.l.b16 %v283
    %v565 = vunpack.c.h.b16 %v283
    %v566 = vunpack.c.l.b16 %v284
    %v567 = vunpack.c.h.b16 %v284
    %v568 = vunpack.c.l.b16 %v285
    %v569 = vunpack.c.h.b16 %v285
    %v570 = vunpack.c.l.b16 %v286
    %v571 = vunpack.c.h.b16 %v286
    %v572 = vunpack.c.l.b16 %v287
    %v573 = vunpack.c.h.b16 %v287
    %v574 = vunpack.c.l.b16 %v288
    %v575 = vunpack.c.h.b16 %v288
    %v576 = vunpack.c.l.b16 %v289
    %v577 = vunpack.c.h.b16 %v289
    %v578 = vunpack.c.l.b16 %v290
    %v579 = vunpack.c.h.b16 %v290
    %v580 = vunpack.c.l.b16 %v291
    %v581 = vunpack.c.h.b16 %v291
    %v582 = vunpack.c.l.b16 %v292
    %v583 = vunpack.c.h.b16 %v292
    %v584 = vunpack.c.l.b16 %v293
    %v585 = vunpack.c.h.b16 %v293
    %v586 = vunpack.c.l.b16 %v294
    %v587 = vunpack.c.h.b16 %v294
    %v588 = vunpack.c.l.b16 %v295
    %v589 = vunpack.c.h.b16 %v295
    %v590 = vunpack.c.l.b16 %v296
    %v591 = vunpack.c.h.b16 %v296
    %v592 = vunpack.c.l.b16 %v297
    %v593 = vunpack.c.h.b16 %v297
    %v594 = vunpack.c.l.b16 %v298
    %v595 = vunpack.c.h.b16 %v298
    %v596 = vunpack.c.l.b16 %v299
    %v597 = vunpack.c.h.b16 %v299
    %v598 = vunpack.c.l.b16 %v300
    %v599 = vunpack.c.h.b16 %v300
    %v600 = vunpack.c.l.b16 %v301
    %v601 = vunpack.c.h.b16 %v301
    %v602 = vunpack.c.l.b16 %v302
    %v603 = vunpack.c.h.b16 %v302
    %v604 = vunpack.c.l.b16 %v303
    %v605 = vunpack.c.h.b16 %v303
    %v606 = vunpack.c.l.b16 %v304
    %v607 = vunpack.c.h.b16 %v304
    %v608 = vunpack.c.l.b16 %v305
    %v609 = vunpack.c.h.b16 %v305
    %v610 = vunpack.c.l.b16 %v306
    %v611 = vunpack.c.h.b16 %v306
    %v612 = vunpack.c.l.b16 %v307
    %v613 = vunpack.c.h.b16 %v307
    %v614 = vpack.c.b16 %v420, %v418
    %v615 = vpack.c.b16 %v421, %v419
    %v616 = vpack.c.b16 %v424, %v422
    %v617 = vpack.c.b16 %v425, %v423
    %v618 = vpack.c.b16 %v428, %v426
    %v619 = vpack.c.b16 %v429, %v427
    %v620 = vpack.c.b16 %v432, %v430
    %v621 = vpack.c.b16 %v433, %v431
    %v622 = vpack.c.b16 %v436, %v434
    %v623 = vpack.c.b16 %v437, %v435
    %v624 = vpack.c.b16 %v440, %v438
    %v625 = vpack.c.b16 %v441, %v439
    %v626 = vpack.c.b16 %v444, %v442
    %v627 = vpack.c.b16 %v445, %v443
    %v628 = vpack.c.b16 %v448, %v446
    %v629 = vpack.c.b16 %v449, %v447
    %v630 = vpack.c.b16 %v452, %v450
    %v631 = vpack.c.b16 %v453, %v451
    %v632 = vpack.c.b16 %v456, %v454
    %v633 = vpack.c.b16 %v457, %v455
    %v634 = vpack.c.b16 %v460, %v458
    %v635 = vpack.c.b16 %v461, %v459
    %v636 = vpack.c.b16 %v464, %v462
    %v637 = vpack.c.b16 %v465, %v463
    %v638 = vpack.c.b16 %v468, %v466
    %v639 = vpack.c.b16 %v469, %v467
    %v640 = vpack.c.b16 %v472, %v470
    %v641 = vpack.c.b16 %v473, %v471
    %v642 = vpack.c.b16 %v476, %v474
    %v643 = vpack.c.b16 %v477, %v475
    %v644 = vpack.c.b16 %v480, %v478
    %v645 = vpack.c.b16 %v481, %v479
    %v646 = vpack.c.b16 %v484, %v482
    %v647 = vpack.c.b16 %v485, %v483
    %v648 = vpack.c.b16 %v488, %v486
    %v649 = vpack.c.b16 %v489, %v487
    %v650 = vpack.c.b16 %v492, %v490
    %v651 = vpack.c.b16 %v493, %v491
    %v652 = vpack.c.b16 %v496, %v494
    %v653 = vpack.c.b16 %v497, %v495
    %v654 = vpack.c.b16 %v500, %v498
    %v655 = vpack.c.b16 %v501, %v499
    %v656 = vpack.c.b16 %v504, %v502
    %v657 = vpack.c.b16 %v505, %v503
    %v658 = vpack.c.b16 %v508, %v506
    %v659 = vpack.c.b16 %v509, %v507
    %v660 = vpack.c.b16 %v512, %v510
    %v661 = vpack.c.b16 %v513, %v511
    %v662 = vpack.c.b16 %v516, %v514
    %v663 = vpack.c.b16 %v517, %v515
    %v664 = vpack.c.b16 %v520, %v518
    %v665 = vpack.c.b16 %v521, %v519
    %v666 = vpack.c.b16 %v524, %v522
    %v667 = vpack.c.b16 %v525, %v523
    %v668 = vpack.c.b16 %v528, %v526
    %v669 = vpack.c.b16 %v529, %v527
    %v670 = vpack.c.b16 %v532, %v530
    %v671 = vpack.c.b16 %v533, %v531
    %v672 = vpack.c.b16 %v536, %v534
    %v673 = vpack.c.b16 %v537, %v535
    %v674 = vpack.c.b16 %v540, %v538
    %v675 = vpack.c.b16 %v541, %v539
    %v676 = vpack.c.b16 %v544, %v542
    %v677 = vpack.c.b16 %v545, %v543
    %v678 = vpack.c.b16 %v548, %v546
    %v679 = vpack.c.b16 %v549, %v547
    %v680 = vpack.c.b16 %v552, %v550
    %v681 = vpack.c.b16 %v553, %v551
    %v682 = vpack.c.b16 %v556, %v554
    %v683 = vpack.c.b16 %v557, %v555
    %v684 = vpack.c.b16 %v560, %v558
    %v685 = vpack.c.b16 %v561, %v559
    %v686 = vpack.c.b16 %v564, %v562
    %v687 = vpack.c.b16 %v565, %v563
    %v688 = vpack.c.b16 %v568, %v566
    %v689 = vpack.c.b16 %v569, %v567
    %v690 = vpack.c.b16 %v572, %v570
    %v691 = vpack.c.b16 %v573, %v571
    %v692 = vpack.c.b16 %v576, %v574
    %v693 = vpack.c.b16 %v577, %v575
    %v694 = vpack.c.b16 %v580, %v578
    %v695 = vpack.c.b16 %v581, %v579
    %v696 = vpack.c.b16 %v584, %v582
    %v697 = vpack.c.b16 %v585, %v583
    %v698 = vpack.c.b16 %v588, %v586
    %v699 = vpack.c.b16 %v589, %v587
    %v700 = vpack.c.b16 %v592, %v590
    %v701 = vpack.c.b16 %v593, %v591
    %v702 = vpack.c.b16 %v596, %v594
    %v703 = vpack.c.b16 %v597, %v595
    %v704 = vpack.c.b16 %v600, %v598
    %v705 = vpack.c.b16 %v601, %v599
    %v706 = vpack.c.b16 %v604, %v602
    %v707 = vpack.c.b16 %v605, %v603
    %v708 = vpack.c.b16 %v608, %v606
    %v709 = vpack.c.b16 %v609, %v607
    %v710 = vpack.c.b16 %v612, %v610
    %v711 = vpack.c.b16 %v613, %v611
    %vm810 = vcmask 130048
    %v812 = vsel %vm810, %v209, 0
    %814 = vmatprep.subr.bf16.mxu0 %v615
    %815 = vmatpush1.bf16.msra.mxu0 %v614
    %816 = vmatprep.subr.bf16.mxu0 %v617
    %817 = vmatpush1.bf16.msra.mxu0 %v616
    %818 = vmatprep.subr.bf16.mxu0 %v619
    %819 = vmatpush1.bf16.msra.mxu0 %v618
    %820 = vmatprep.subr.bf16.mxu0 %v621
    %821 = vmatpush1.bf16.msra.mxu0 %v620
    %822 = vmatprep.subr.bf16.mxu0 %v623
    %823 = vmatpush1.bf16.msra.mxu0 %v622
    %824 = vmatprep.subr.bf16.mxu0 %v625
    %825 = vmatpush1.bf16.msra.mxu0 %v624
    %826 = vmatprep.subr.bf16.mxu0 %v627
    %827 = vmatpush1.bf16.msra.mxu0 %v626
    %828 = vmatprep.subr.bf16.mxu0 %v629
    %829 = vmatpush1.bf16.msra.mxu0 %v628
    %830 = vmatprep.subr.bf16.mxu0 %v631
    %831 = vmatpush1.bf16.msra.mxu0 %v630
    %832 = vmatprep.subr.bf16.mxu0 %v633
    %833 = vmatpush1.bf16.msra.mxu0 %v632
    %834 = vmatprep.subr.bf16.mxu0 %v635
    %835 = vmatpush1.bf16.msra.mxu0 %v634
    %836 = vmatprep.subr.bf16.mxu0 %v637
    %837 = vmatpush1.bf16.msra.mxu0 %v636
    %838 = vmatprep.subr.bf16.mxu0 %v639
    %839 = vmatpush1.bf16.msra.mxu0 %v638
    %840 = vmatprep.subr.bf16.mxu0 %v641
    %841 = vmatpush1.bf16.msra.mxu0 %v640
    %842 = vmatprep.subr.bf16.mxu0 %v643
    %843 = vmatpush1.bf16.msra.mxu0 %v642
    %844 = vmatprep.subr.bf16.mxu0 %v645
    %845 = vmatpush1.bf16.msra.mxu0 %v644
    %846 = vmatprep.mubr.bf16.mxu0 %v204
    %847 = vmatmul.mubr.bf16.gmra.mrb[0].mxu0 %v203
    %v848 = vpop.f32.mrb[0].mxu0
    %v849 = vadd.f32 %v313, %v848
    %v850 = vpop.f32.mrb[0].mxu0
    %v851 = vadd.f32 %v317, %v850
    %v852 = vpop.f32.mrb[0].mxu0
    %v853 = vpop.f32.mrb[0].mxu0
    %854 = vdwg.mxu0
    %855 = vmatprep.subr.bf16.mxu0 %v647
    %856 = vmatpush1.bf16.msra.mxu0 %v646
    %857 = vmatprep.subr.bf16.mxu0 %v649
    %858 = vmatpush1.bf16.msra.mxu0 %v648
    %859 = vmatprep.subr.bf16.mxu0 %v651
    %860 = vmatpush1.bf16.msra.mxu0 %v650
    %861 = vmatprep.subr.bf16.mxu0 %v653
    %862 = vmatpush1.bf16.msra.mxu0 %v652
    %863 = vmatprep.subr.bf16.mxu0 %v655
    %864 = vmatpush1.bf16.msra.mxu0 %v654
    %865 = vmatprep.subr.bf16.mxu0 %v657
    %866 = vmatpush1.bf16.msra.mxu0 %v656
    %867 = vmatprep.subr.bf16.mxu0 %v659
    %868 = vmatpush1.bf16.msra.mxu0 %v658
    %869 = vmatprep.subr.bf16.mxu0 %v661
    %870 = vmatpush1.bf16.msra.mxu0 %v660
    %871 = vmatprep.subr.bf16.mxu0 %v663
    %872 = vmatpush1.bf16.msra.mxu0 %v662
    %873 = vmatprep.subr.bf16.mxu0 %v665
    %874 = vmatpush1.bf16.msra.mxu0 %v664
    %875 = vmatprep.subr.bf16.mxu0 %v667
    %876 = vmatpush1.bf16.msra.mxu0 %v666
    %877 = vmatprep.subr.bf16.mxu0 %v669
    %878 = vmatpush1.bf16.msra.mxu0 %v668
    %879 = vmatprep.subr.bf16.mxu0 %v671
    %880 = vmatpush1.bf16.msra.mxu0 %v670
    %881 = vmatprep.subr.bf16.mxu0 %v673
    %882 = vmatpush1.bf16.msra.mxu0 %v672
    %883 = vmatprep.subr.bf16.mxu0 %v675
    %884 = vmatpush1.bf16.msra.mxu0 %v674
    %885 = vmatprep.subr.bf16.mxu0 %v677
    %886 = vmatpush1.bf16.msra.mxu0 %v676
    %887 = vmatprep.mubr.bf16.mxu0 %v206
    %888 = vmatmul.mubr.bf16.gmra.mrb[0].mxu0 %v205
    %v889 = vpop.f32.mrb[0].mxu0
    %v890 = vadd.f32 %v849, %v889
    %v891 = vpop.f32.mrb[0].mxu0
    %v892 = vadd.f32 %v851, %v891
    %v893 = vpop.f32.mrb[0].mxu0
    %v894 = vpop.f32.mrb[0].mxu0
    %895 = vdwg.mxu0
    %896 = vmatprep.subr.bf16.mxu0 %v679
    %897 = vmatpush1.bf16.msra.mxu0 %v678
    %898 = vmatprep.subr.bf16.mxu0 %v681
    %899 = vmatpush1.bf16.msra.mxu0 %v680
    %900 = vmatprep.subr.bf16.mxu0 %v683
    %901 = vmatpush1.bf16.msra.mxu0 %v682
    %902 = vmatprep.subr.bf16.mxu0 %v685
    %903 = vmatpush1.bf16.msra.mxu0 %v684
    %904 = vmatprep.subr.bf16.mxu0 %v687
    %905 = vmatpush1.bf16.msra.mxu0 %v686
    %906 = vmatprep.subr.bf16.mxu0 %v689
    %907 = vmatpush1.bf16.msra.mxu0 %v688
    %908 = vmatprep.subr.bf16.mxu0 %v691
    %909 = vmatpush1.bf16.msra.mxu0 %v690
    %910 = vmatprep.subr.bf16.mxu0 %v693
    %911 = vmatpush1.bf16.msra.mxu0 %v692
    %912 = vmatprep.subr.bf16.mxu0 %v695
    %913 = vmatpush1.bf16.msra.mxu0 %v694
    %914 = vmatprep.subr.bf16.mxu0 %v697
    %915 = vmatpush1.bf16.msra.mxu0 %v696
    %916 = vmatprep.subr.bf16.mxu0 %v699
    %917 = vmatpush1.bf16.msra.mxu0 %v698
    %918 = vmatprep.subr.bf16.mxu0 %v701
    %919 = vmatpush1.bf16.msra.mxu0 %v700
    %920 = vmatprep.subr.bf16.mxu0 %v703
    %921 = vmatpush1.bf16.msra.mxu0 %v702
    %922 = vmatprep.subr.bf16.mxu0 %v705
    %923 = vmatpush1.bf16.msra.mxu0 %v704
    %924 = vmatprep.subr.bf16.mxu0 %v707
    %925 = vmatpush1.bf16.msra.mxu0 %v706
    %926 = vmatprep.subr.bf16.mxu0 %v709
    %927 = vmatpush1.bf16.msra.mxu0 %v708
    %928 = vmatprep.mubr.bf16.mxu0 %v208
    %929 = vmatmul.mubr.bf16.gmra.mrb[0].mxu0 %v207
    %v930 = vpop.f32.mrb[0].mxu0
    %v931 = vadd.f32 %v890, %v930
    %v932 = vpop.f32.mrb[0].mxu0
    %v933 = vadd.f32 %v892, %v932
    %v934 = vpop.f32.mrb[0].mxu0
    %v935 = vpop.f32.mrb[0].mxu0
    %936 = vdwg.mxu0
    %937 = vmatprep.subr.bf16.mxu0 %v711
    %938 = vmatpush1.bf16.msra.mxu0 %v710
    %939 = vmatprep.subr.bf16.mxu0 0
    %940 = vmatpush1.bf16.msra.mxu0 0
    %941 = vmatprep.subr.bf16.mxu0 0
    %942 = vmatpush1.bf16.msra.mxu0 0
    %943 = vmatprep.subr.bf16.mxu0 0
    %944 = vmatpush1.bf16.msra.mxu0 0
    %945 = vmatprep.subr.bf16.mxu0 0
    %946 = vmatpush1.bf16.msra.mxu0 0
    %947 = vmatprep.subr.bf16.mxu0 0
    %948 = vmatpush1.bf16.msra.mxu0 0
    %949 = vmatprep.subr.bf16.mxu0 0
    %950 = vmatpush1.bf16.msra.mxu0 0
    %951 = vmatprep.subr.bf16.mxu0 0
    %952 = vmatpush1.bf16.msra.mxu0 0
    %953 = vmatprep.subr.bf16.mxu0 0
    %954 = vmatpush1.bf16.msra.mxu0 0
    %955 = vmatprep.subr.bf16.mxu0 0
    %956 = vmatpush1.bf16.msra.mxu0 0
    %957 = vmatprep.subr.bf16.mxu0 0
    %958 = vmatpush1.bf16.msra.mxu0 0
    %959 = vmatprep.subr.bf16.mxu0 0
    %960 = vmatpush1.bf16.msra.mxu0 0
    %961 = vmatprep.subr.bf16.mxu0 0
    %962 = vmatpush1.bf16.msra.mxu0 0
    %963 = vmatprep.subr.bf16.mxu0 0
    %964 = vmatpush1.bf16.msra.mxu0 0
    %965 = vmatprep.subr.bf16.mxu0 0
    %966 = vmatpush1.bf16.msra.mxu0 0
    %967 = vmatprep.subr.bf16.mxu0 0
    %968 = vmatpush1.bf16.msra.mxu0 0
    %969 = vmatprep.mubr.bf16.mxu0 0
    %970 = vmatmul.mubr.bf16.gmra.mrb[0].mxu0 %v812
    %v971 = vpop.f32.mrb[0].mxu0
    %v972 = vadd.f32 %v931, %v971
    %v973 = vpop.f32.mrb[0].mxu0
    %v974 = vadd.f32 %v933, %v973
    %v975 = vpop.f32.mrb[0].mxu0
    %v976 = vpop.f32.mrb[0].mxu0
    %977 = vdwg.mxu0
    %v978 = vmax.f32 %v972, 0.0
    %v979 = vmax.f32 %v974, 0.0
    %v980 = vpack.c.bf16 %v978, %v978
    %v981 = vpack.c.bf16 %v979, %v979
    %v982 = vld [vmem:[#allocation7] sm:$0xff]
    %v983 = vld [vmem:[#allocation7 + $0x8] sm:$0xff]
    %v984 = vld [vmem:[#allocation7 + $0x10] sm:$0xff]
    %v985 = vld [vmem:[#allocation7 + $0x18] sm:$0xff]
    %v986 = vld [vmem:[#allocation7 + $0x20] sm:$0xff]
    %v987 = vld [vmem:[#allocation7 + $0x28] sm:$0xff]
    %v988 = vld [vmem:[#allocation7 + $0x30] sm:$0xff]
    %v989 = vld [vmem:[#allocation7 + $0x38] sm:$0xff]
    %v990 = vld [vmem:[#allocation7 + $0x40] sm:$0xff]
    %v991 = vld [vmem:[#allocation7 + $0x48] sm:$0xff]
    %v992 = vld [vmem:[#allocation7 + $0x50] sm:$0xff]
    %v993 = vld [vmem:[#allocation7 + $0x58] sm:$0xff]
    %v994 = vld [vmem:[#allocation7 + $0x60] sm:$0xff]
    %v995 = vld [vmem:[#allocation7 + $0x68] sm:$0xff]
    %v996 = vld [vmem:[#allocation7 + $0x70] sm:$0xff]
    %v997 = vld [vmem:[#allocation7 + $0x78] sm:$0xff]
    %v998 = vld [vmem:[#allocation7 + $0x80] sm:$0xff]
    %v999 = vld [vmem:[#allocation7 + $0x88] sm:$0xff]
    %v1000 = vld [vmem:[#allocation7 + $0x90] sm:$0xff]
    %v1001 = vld [vmem:[#allocation7 + $0x98] sm:$0xff]
    %v1002 = vld [vmem:[#allocation7 + $0xa0] sm:$0xff]
    %v1003 = vld [vmem:[#allocation7 + $0xa8] sm:$0xff]
    %v1004 = vld [vmem:[#allocation7 + $0xb0] sm:$0xff]
    %v1005 = vld [vmem:[#allocation7 + $0xb8] sm:$0xff]
    %v1006 = vld [vmem:[#allocation7 + $0xc0] sm:$0xff]
    %v1007 = vld [vmem:[#allocation7 + $0xc8] sm:$0xff]
    %v1008 = vld [vmem:[#allocation7 + $0xd0] sm:$0xff]
    %v1009 = vld [vmem:[#allocation7 + $0xd8] sm:$0xff]
    %v1010 = vld [vmem:[#allocation7 + $0xe0] sm:$0xff]
    %v1011 = vld [vmem:[#allocation7 + $0xe8] sm:$0xff]
    %v1012 = vld [vmem:[#allocation7 + $0xf0] sm:$0xff]
    %v1013 = vld [vmem:[#allocation7 + $0xf8] sm:$0xff]
    %v1014 = vld [vmem:[#allocation8] sm:$0x3]
    %v1016 = vlaneseq
    %v1017 = vshrl.u32 %v1016, 7
    %v1018 = vsub.s32 0, %v1017
    %v1019 = vrot.slane %v1014, %v1018
    %v1020 = vlaneseq
    %v1021 = vshrl.u32 %v1020, 7
    %v1022 = vsub.s32 1, %v1021
    %v1023 = vrot.slane %v1014, %v1022
    %v1058 = vunpack.c.l.b16 %v982
    %v1059 = vunpack.c.h.b16 %v982
    %v1060 = vunpack.c.l.b16 %v983
    %v1061 = vunpack.c.h.b16 %v983
    %v1062 = vunpack.c.l.b16 %v984
    %v1063 = vunpack.c.h.b16 %v984
    %v1064 = vunpack.c.l.b16 %v985
    %v1065 = vunpack.c.h.b16 %v985
    %v1066 = vunpack.c.l.b16 %v986
    %v1067 = vunpack.c.h.b16 %v986
    %v1068 = vunpack.c.l.b16 %v987
    %v1069 = vunpack.c.h.b16 %v987
    %v1070 = vunpack.c.l.b16 %v988
    %v1071 = vunpack.c.h.b16 %v988
    %v1072 = vunpack.c.l.b16 %v989
    %v1073 = vunpack.c.h.b16 %v989
    %v1074 = vunpack.c.l.b16 %v990
    %v1075 = vunpack.c.h.b16 %v990
    %v1076 = vunpack.c.l.b16 %v991
    %v1077 = vunpack.c.h.b16 %v991
    %v1078 = vunpack.c.l.b16 %v992
    %v1079 = vunpack.c.h.b16 %v992
    %v1080 = vunpack.c.l.b16 %v993
    %v1081 = vunpack.c.h.b16 %v993
    %v1082 = vunpack.c.l.b16 %v994
    %v1083 = vunpack.c.h.b16 %v994
    %v1084 = vunpack.c.l.b16 %v995
    %v1085 = vunpack.c.h.b16 %v995
    %v1086 = vunpack.c.l.b16 %v996
    %v1087 = vunpack.c.h.b16 %v996
    %v1088 = vunpack.c.l.b16 %v997
    %v1089 = vunpack.c.h.b16 %v997
    %v1090 = vunpack.c.l.b16 %v998
    %v1091 = vunpack.c.h.b16 %v998
    %v1092 = vunpack.c.l.b16 %v999
    %v1093 = vunpack.c.h.b16 %v999
    %v1094 = vunpack.c.l.b16 %v1000
    %v1095 = vunpack.c.h.b16 %v1000
    %v1096 = vunpack.c.l.b16 %v1001
    %v1097 = vunpack.c.h.b16 %v1001
    %v1098 = vunpack.c.l.b16 %v1002
    %v1099 = vunpack.c.h.b16 %v1002
    %v1100 = vunpack.c.l.b16 %v1003
    %v1101 = vunpack.c.h.b16 %v1003
    %v1102 = vunpack.c.l.b16 %v1004
    %v1103 = vunpack.c.h.b16 %v1004
    %v1104 = vunpack.c.l.b16 %v1005
    %v1105 = vunpack.c.h.b16 %v1005
    %v1106 = vunpack.c.l.b16 %v1006
    %v1107 = vunpack.c.h.b16 %v1006
    %v1108 = vunpack.c.l.b16 %v1007
    %v1109 = vunpack.c.h.b16 %v1007
    %v1110 = vunpack.c.l.b16 %v1008
    %v1111 = vunpack.c.h.b16 %v1008
    %v1112 = vunpack.c.l.b16 %v1009
    %v1113 = vunpack.c.h.b16 %v1009
    %v1114 = vunpack.c.l.b16 %v1010
    %v1115 = vunpack.c.h.b16 %v1010
    %v1116 = vunpack.c.l.b16 %v1011
    %v1117 = vunpack.c.h.b16 %v1011
    %v1118 = vunpack.c.l.b16 %v1012
    %v1119 = vunpack.c.h.b16 %v1012
    %v1120 = vunpack.c.l.b16 %v1013
    %v1121 = vunpack.c.h.b16 %v1013
    %v1122 = vpack.c.b16 %v1060, %v1058
    %v1123 = vpack.c.b16 %v1061, %v1059
    %v1124 = vpack.c.b16 %v1064, %v1062
    %v1125 = vpack.c.b16 %v1065, %v1063
    %v1126 = vpack.c.b16 %v1068, %v1066
    %v1127 = vpack.c.b16 %v1069, %v1067
    %v1128 = vpack.c.b16 %v1072, %v1070
    %v1129 = vpack.c.b16 %v1073, %v1071
    %v1130 = vpack.c.b16 %v1076, %v1074
    %v1131 = vpack.c.b16 %v1077, %v1075
    %v1132 = vpack.c.b16 %v1080, %v1078
    %v1133 = vpack.c.b16 %v1081, %v1079
    %v1134 = vpack.c.b16 %v1084, %v1082
    %v1135 = vpack.c.b16 %v1085, %v1083
    %v1136 = vpack.c.b16 %v1088, %v1086
    %v1137 = vpack.c.b16 %v1089, %v1087
    %v1138 = vpack.c.b16 %v1092, %v1090
    %v1139 = vpack.c.b16 %v1093, %v1091
    %v1140 = vpack.c.b16 %v1096, %v1094
    %v1141 = vpack.c.b16 %v1097, %v1095
    %v1142 = vpack.c.b16 %v1100, %v1098
    %v1143 = vpack.c.b16 %v1101, %v1099
    %v1144 = vpack.c.b16 %v1104, %v1102
    %v1145 = vpack.c.b16 %v1105, %v1103
    %v1146 = vpack.c.b16 %v1108, %v1106
    %v1147 = vpack.c.b16 %v1109, %v1107
    %v1148 = vpack.c.b16 %v1112, %v1110
    %v1149 = vpack.c.b16 %v1113, %v1111
    %v1150 = vpack.c.b16 %v1116, %v1114
    %v1151 = vpack.c.b16 %v1117, %v1115
    %v1152 = vpack.c.b16 %v1120, %v1118
    %v1153 = vpack.c.b16 %v1121, %v1119
    %1186 = vmatprep.subr.bf16.mxu0 %v1123
    %1187 = vmatpush1.bf16.msra.mxu0 %v1122
    %1188 = vmatprep.subr.bf16.mxu0 %v1125
    %1189 = vmatpush1.bf16.msra.mxu0 %v1124
    %1190 = vmatprep.subr.bf16.mxu0 %v1127
    %1191 = vmatpush1.bf16.msra.mxu0 %v1126
    %1192 = vmatprep.subr.bf16.mxu0 %v1129
    %1193 = vmatpush1.bf16.msra.mxu0 %v1128
    %1194 = vmatprep.subr.bf16.mxu0 %v1131
    %1195 = vmatpush1.bf16.msra.mxu0 %v1130
    %1196 = vmatprep.subr.bf16.mxu0 %v1133
    %1197 = vmatpush1.bf16.msra.mxu0 %v1132
    %1198 = vmatprep.subr.bf16.mxu0 %v1135
    %1199 = vmatpush1.bf16.msra.mxu0 %v1134
    %1200 = vmatprep.subr.bf16.mxu0 %v1137
    %1201 = vmatpush1.bf16.msra.mxu0 %v1136
    %1202 = vmatprep.subr.bf16.mxu0 %v1139
    %1203 = vmatpush1.bf16.msra.mxu0 %v1138
    %1204 = vmatprep.subr.bf16.mxu0 %v1141
    %1205 = vmatpush1.bf16.msra.mxu0 %v1140
    %1206 = vmatprep.subr.bf16.mxu0 %v1143
    %1207 = vmatpush1.bf16.msra.mxu0 %v1142
    %1208 = vmatprep.subr.bf16.mxu0 %v1145
    %1209 = vmatpush1.bf16.msra.mxu0 %v1144
    %1210 = vmatprep.subr.bf16.mxu0 %v1147
    %1211 = vmatpush1.bf16.msra.mxu0 %v1146
    %1212 = vmatprep.subr.bf16.mxu0 %v1149
    %1213 = vmatpush1.bf16.msra.mxu0 %v1148
    %1214 = vmatprep.subr.bf16.mxu0 %v1151
    %1215 = vmatpush1.bf16.msra.mxu0 %v1150
    %1216 = vmatprep.subr.bf16.mxu0 %v1153
    %1217 = vmatpush1.bf16.msra.mxu0 %v1152
    %1218 = vmatprep.mubr.bf16.mxu0 %v981
    %1219 = vmatmul.mubr.bf16.gmra.mrb[0].mxu0 %v980
    %v1220 = vpop.f32.mrb[0].mxu0
    %v1221 = vadd.f32 %v1019, %v1220
    %v1222 = vpop.f32.mrb[0].mxu0
    %v1223 = vadd.f32 %v1023, %v1222
    %v1224 = vpop.f32.mrb[0].mxu0
    %v1225 = vpop.f32.mrb[0].mxu0
    %1226 = vdwg.mxu0
    %v1227 = vmax.f32 %v1221, 0.0
    %v1228 = vmax.f32 %v1223, 0.0
    %v1229 = vpack.c.bf16 %v1227, %v1227
    %v1230 = vpack.c.bf16 %v1228, %v1228
    %v1231 = vld [vmem:[#allocation10] sm:$0xf]
    %v1232 = vld [vmem:[#allocation10 + $0x4] sm:$0xf]
    %v1233 = vld [vmem:[#allocation10 + $0x8] sm:$0xf]
    %v1234 = vld [vmem:[#allocation10 + $0xc] sm:$0xf]
    %v1235 = vld [vmem:[#allocation10 + $0x10] sm:$0xf]
    %v1236 = vld [vmem:[#allocation10 + $0x14] sm:$0xf]
    %v1237 = vld [vmem:[#allocation10 + $0x18] sm:$0xf]
    %v1238 = vld [vmem:[#allocation10 + $0x1c] sm:$0xf]
    %v1239 = vld [vmem:[#allocation10 + $0x20] sm:$0xf]
    %v1240 = vld [vmem:[#allocation10 + $0x24] sm:$0xf]
    %v1241 = vld [vmem:[#allocation10 + $0x28] sm:$0xf]
    %v1242 = vld [vmem:[#allocation10 + $0x2c] sm:$0xf]
    %v1243 = vld [vmem:[#allocation10 + $0x30] sm:$0xf]
    %v1244 = vld [vmem:[#allocation10 + $0x34] sm:$0xf]
    %v1245 = vld [vmem:[#allocation10 + $0x38] sm:$0xf]
    %v1246 = vld [vmem:[#allocation10 + $0x3c] sm:$0xf]
    %v1247 = vld [vmem:[#allocation10 + $0x40] sm:$0xf]
    %v1248 = vld [vmem:[#allocation10 + $0x44] sm:$0xf]
    %v1249 = vld [vmem:[#allocation10 + $0x48] sm:$0xf]
    %v1250 = vld [vmem:[#allocation10 + $0x4c] sm:$0xf]
    %v1251 = vld [vmem:[#allocation10 + $0x50] sm:$0xf]
    %v1252 = vld [vmem:[#allocation10 + $0x54] sm:$0xf]
    %v1253 = vld [vmem:[#allocation10 + $0x58] sm:$0xf]
    %v1254 = vld [vmem:[#allocation10 + $0x5c] sm:$0xf]
    %v1255 = vld [vmem:[#allocation10 + $0x60] sm:$0xf]
    %v1256 = vld [vmem:[#allocation10 + $0x64] sm:$0xf]
    %v1257 = vld [vmem:[#allocation10 + $0x68] sm:$0xf]
    %v1258 = vld [vmem:[#allocation10 + $0x6c] sm:$0xf]
    %v1259 = vld [vmem:[#allocation10 + $0x70] sm:$0xf]
    %v1260 = vld [vmem:[#allocation10 + $0x74] sm:$0xf]
    %v1261 = vld [vmem:[#allocation10 + $0x78] sm:$0xf]
    %v1262 = vld [vmem:[#allocation10 + $0x7c] sm:$0xf]
    %v1263 = vld [vmem:[#allocation11] sm:$0x1]
    %v1265 = vlaneseq
    %v1266 = vshrl.u32 %v1265, 7
    %v1267 = vsub.s32 0, %v1266
    %v1268 = vrot.slane %v1263, %v1267
    %v1302 = vunpack.c.l.b16 %v1231
    %v1303 = vunpack.c.l.b16 %v1232
    %v1304 = vunpack.c.l.b16 %v1233
    %v1305 = vunpack.c.l.b16 %v1234
    %v1306 = vunpack.c.l.b16 %v1235
    %v1307 = vunpack.c.l.b16 %v1236
    %v1308 = vunpack.c.l.b16 %v1237
    %v1309 = vunpack.c.l.b16 %v1238
    %v1310 = vunpack.c.l.b16 %v1239
    %v1311 = vunpack.c.l.b16 %v1240
    %v1312 = vunpack.c.l.b16 %v1241
    %v1313 = vunpack.c.l.b16 %v1242
    %v1314 = vunpack.c.l.b16 %v1243
    %v1315 = vunpack.c.l.b16 %v1244
    %v1316 = vunpack.c.l.b16 %v1245
    %v1317 = vunpack.c.l.b16 %v1246
    %v1318 = vunpack.c.l.b16 %v1247
    %v1319 = vunpack.c.l.b16 %v1248
    %v1320 = vunpack.c.l.b16 %v1249
    %v1321 = vunpack.c.l.b16 %v1250
    %v1322 = vunpack.c.l.b16 %v1251
    %v1323 = vunpack.c.l.b16 %v1252
    %v1324 = vunpack.c.l.b16 %v1253
    %v1325 = vunpack.c.l.b16 %v1254
    %v1326 = vunpack.c.l.b16 %v1255
    %v1327 = vunpack.c.l.b16 %v1256
    %v1328 = vunpack.c.l.b16 %v1257
    %v1329 = vunpack.c.l.b16 %v1258
    %v1330 = vunpack.c.l.b16 %v1259
    %v1331 = vunpack.c.l.b16 %v1260
    %v1332 = vunpack.c.l.b16 %v1261
    %v1333 = vunpack.c.l.b16 %v1262
    %v1334 = vpack.c.b16 %v1303, %v1302
    %v1335 = vpack.c.b16 %v1305, %v1304
    %v1336 = vpack.c.b16 %v1307, %v1306
    %v1337 = vpack.c.b16 %v1309, %v1308
    %v1338 = vpack.c.b16 %v1311, %v1310
    %v1339 = vpack.c.b16 %v1313, %v1312
    %v1340 = vpack.c.b16 %v1315, %v1314
    %v1341 = vpack.c.b16 %v1317, %v1316
    %v1342 = vpack.c.b16 %v1319, %v1318
    %v1343 = vpack.c.b16 %v1321, %v1320
    %v1344 = vpack.c.b16 %v1323, %v1322
    %v1345 = vpack.c.b16 %v1325, %v1324
    %v1346 = vpack.c.b16 %v1327, %v1326
    %v1347 = vpack.c.b16 %v1329, %v1328
    %v1348 = vpack.c.b16 %v1331, %v1330
    %v1349 = vpack.c.b16 %v1333, %v1332
    %1366 = vmatprep.subr.bf16.mxu0 0
    %1367 = vmatpush1.bf16.msra.mxu0 %v1334
    %1368 = vmatprep.subr.bf16.mxu0 0
    %1369 = vmatpush1.bf16.msra.mxu0 %v1335
    %1370 = vmatprep.subr.bf16.mxu0 0
    %1371 = vmatpush1.bf16.msra.mxu0 %v1336
    %1372 = vmatprep.subr.bf16.mxu0 0
    %1373 = vmatpush1.bf16.msra.mxu0 %v1337
    %1374 = vmatprep.subr.bf16.mxu0 0
    %1375 = vmatpush1.bf16.msra.mxu0 %v1338
    %1376 = vmatprep.subr.bf16.mxu0 0
    %1377 = vmatpush1.bf16.msra.mxu0 %v1339
    %1378 = vmatprep.subr.bf16.mxu0 0
    %1379 = vmatpush1.bf16.msra.mxu0 %v1340
    %1380 = vmatprep.subr.bf16.mxu0 0
    %1381 = vmatpush1.bf16.msra.mxu0 %v1341
    %1382 = vmatprep.subr.bf16.mxu0 0
    %1383 = vmatpush1.bf16.msra.mxu0 %v1342
    %1384 = vmatprep.subr.bf16.mxu0 0
    %1385 = vmatpush1.bf16.msra.mxu0 %v1343
    %1386 = vmatprep.subr.bf16.mxu0 0
    %1387 = vmatpush1.bf16.msra.mxu0 %v1344
    %1388 = vmatprep.subr.bf16.mxu0 0
    %1389 = vmatpush1.bf16.msra.mxu0 %v1345
    %1390 = vmatprep.subr.bf16.mxu0 0
    %1391 = vmatpush1.bf16.msra.mxu0 %v1346
    %1392 = vmatprep.subr.bf16.mxu0 0
    %1393 = vmatpush1.bf16.msra.mxu0 %v1347
    %1394 = vmatprep.subr.bf16.mxu0 0
    %1395 = vmatpush1.bf16.msra.mxu0 %v1348
    %1396 = vmatprep.subr.bf16.mxu0 0
    %1397 = vmatpush1.bf16.msra.mxu0 %v1349
    %1398 = vmatprep.mubr.bf16.mxu0 %v1230
    %1399 = vmatmul.mubr.bf16.gmra.mrb[0].mxu0 %v1229
    %v1400 = vpop.f32.mrb[0].mxu0
    %v1401 = vadd.f32 %v1268, %v1400
    %v1402 = vpop.f32.mrb[0].mxu0
    %v1403 = vpop.f32.mrb[0].mxu0
    %v1404 = vpop.f32.mrb[0].mxu0
    %1405 = vdwg.mxu0
    %v1406 = vld [vmem:[%s7] sm:$0xff]
    %v1407 = vld [vmem:[%s7 + $0x8] sm:$0xff]
    %v1408 = vld [vmem:[%s7 + $0x10] sm:$0xf]
    %1410 = vset.pattern.permute.xlu0 0
    %1411 = vperm.xlu0 %1410, %v1401
    %v1412 = vpop.permute.xlu0 %1411
    %v1414 = vlaneseq
    %v1415 = vshrl.u32 %v1414, 7
    %v1416 = vsub.s32 0, %v1415
    %v1417 = vrot.slane %v1406, %v1416
    %v1418 = vmul.f32 %v1412, %v1417
    %1419 = vset.pattern.permute.xlu0 1
    %1420 = vperm.xlu0 %1419, %v1401
    %v1421 = vpop.permute.xlu0 %1420
    %v1423 = vlaneseq
    %v1424 = vshrl.u32 %v1423, 7
    %v1425 = vsub.s32 1, %v1424
    %v1426 = vrot.slane %v1406, %v1425
    %v1427 = vmul.f32 %v1421, %v1426
    %v1428 = vmax.f32 %v1418, %v1427
    %1429 = vset.pattern.permute.xlu0 2
    %1430 = vperm.xlu0 %1429, %v1401
    %v1431 = vpop.permute.xlu0 %1430
    %v1433 = vlaneseq
    %v1434 = vshrl.u32 %v1433, 7
    %v1435 = vsub.s32 2, %v1434
    %v1436 = vrot.slane %v1406, %v1435
    %v1437 = vmul.f32 %v1431, %v1436
    %v1438 = vmax.f32 %v1428, %v1437
    %1439 = vset.pattern.permute.xlu0 3
    %1440 = vperm.xlu0 %1439, %v1401
    %v1441 = vpop.permute.xlu0 %1440
    %v1443 = vlaneseq
    %v1444 = vshrl.u32 %v1443, 7
    %v1445 = vsub.s32 3, %v1444
    %v1446 = vrot.slane %v1406, %v1445
    %v1447 = vmul.f32 %v1441, %v1446
    %v1448 = vmax.f32 %v1438, %v1447
    %1449 = vset.pattern.permute.xlu0 4
    %1450 = vperm.xlu0 %1449, %v1401
    %v1451 = vpop.permute.xlu0 %1450
    %v1453 = vlaneseq
    %v1454 = vshrl.u32 %v1453, 7
    %v1455 = vsub.s32 4, %v1454
    %v1456 = vrot.slane %v1406, %v1455
    %v1457 = vmul.f32 %v1451, %v1456
    %v1458 = vmax.f32 %v1448, %v1457
    %1459 = vset.pattern.permute.xlu0 5
    %1460 = vperm.xlu0 %1459, %v1401
    %v1461 = vpop.permute.xlu0 %1460
    %v1463 = vlaneseq
    %v1464 = vshrl.u32 %v1463, 7
    %v1465 = vsub.s32 5, %v1464
    %v1466 = vrot.slane %v1406, %v1465
    %v1467 = vmul.f32 %v1461, %v1466
    %v1468 = vmax.f32 %v1458, %v1467
    %1469 = vset.pattern.permute.xlu0 6
    %1470 = vperm.xlu0 %1469, %v1401
    %v1471 = vpop.permute.xlu0 %1470
    %v1473 = vlaneseq
    %v1474 = vshrl.u32 %v1473, 7
    %v1475 = vsub.s32 6, %v1474
    %v1476 = vrot.slane %v1406, %v1475
    %v1477 = vmul.f32 %v1471, %v1476
    %v1478 = vmax.f32 %v1468, %v1477
    %1479 = vset.pattern.permute.xlu0 7
    %1480 = vperm.xlu0 %1479, %v1401
    %v1481 = vpop.permute.xlu0 %1480
    %v1483 = vlaneseq
    %v1484 = vshrl.u32 %v1483, 7
    %v1485 = vsub.s32 7, %v1484
    %v1486 = vrot.slane %v1406, %v1485
    %v1487 = vmul.f32 %v1481, %v1486
    %v1488 = vmax.f32 %v1478, %v1487
    %1489 = vset.pattern.permute.xlu0 8
    %1490 = vperm.xlu0 %1489, %v1401
    %v1491 = vpop.permute.xlu0 %1490
    %v1493 = vlaneseq
    %v1494 = vshrl.u32 %v1493, 7
    %v1495 = vsub.s32 0, %v1494
    %v1496 = vrot.slane %v1407, %v1495
    %v1497 = vmul.f32 %v1491, %v1496
    %v1498 = vmax.f32 %v1488, %v1497
    %1499 = vset.pattern.permute.xlu0 9
    %1500 = vperm.xlu0 %1499, %v1401
    %v1501 = vpop.permute.xlu0 %1500
    %v1503 = vlaneseq
    %v1504 = vshrl.u32 %v1503, 7
    %v1505 = vsub.s32 1, %v1504
    %v1506 = vrot.slane %v1407, %v1505
    %v1507 = vmul.f32 %v1501, %v1506
    %v1508 = vmax.f32 %v1498, %v1507
    %1509 = vset.pattern.permute.xlu0 10
    %1510 = vperm.xlu0 %1509, %v1401
    %v1511 = vpop.permute.xlu0 %1510
    %v1513 = vlaneseq
    %v1514 = vshrl.u32 %v1513, 7
    %v1515 = vsub.s32 2, %v1514
    %v1516 = vrot.slane %v1407, %v1515
    %v1517 = vmul.f32 %v1511, %v1516
    %v1518 = vmax.f32 %v1508, %v1517
    %1519 = vset.pattern.permute.xlu0 11
    %1520 = vperm.xlu0 %1519, %v1401
    %v1521 = vpop.permute.xlu0 %1520
    %v1523 = vlaneseq
    %v1524 = vshrl.u32 %v1523, 7
    %v1525 = vsub.s32 3, %v1524
    %v1526 = vrot.slane %v1407, %v1525
    %v1527 = vmul.f32 %v1521, %v1526
    %v1528 = vmax.f32 %v1518, %v1527
    %1529 = vset.pattern.permute.xlu0 12
    %1530 = vperm.xlu0 %1529, %v1401
    %v1531 = vpop.permute.xlu0 %1530
    %v1533 = vlaneseq
    %v1534 = vshrl.u32 %v1533, 7
    %v1535 = vsub.s32 4, %v1534
    %v1536 = vrot.slane %v1407, %v1535
    %v1537 = vmul.f32 %v1531, %v1536
    %v1538 = vmax.f32 %v1528, %v1537
    %1539 = vset.pattern.permute.xlu0 13
    %1540 = vperm.xlu0 %1539, %v1401
    %v1541 = vpop.permute.xlu0 %1540
    %v1543 = vlaneseq
    %v1544 = vshrl.u32 %v1543, 7
    %v1545 = vsub.s32 5, %v1544
    %v1546 = vrot.slane %v1407, %v1545
    %v1547 = vmul.f32 %v1541, %v1546
    %v1548 = vmax.f32 %v1538, %v1547
    %1549 = vset.pattern.permute.xlu0 14
    %1550 = vperm.xlu0 %1549, %v1401
    %v1551 = vpop.permute.xlu0 %1550
    %v1553 = vlaneseq
    %v1554 = vshrl.u32 %v1553, 7
    %v1555 = vsub.s32 6, %v1554
    %v1556 = vrot.slane %v1407, %v1555
    %v1557 = vmul.f32 %v1551, %v1556
    %v1558 = vmax.f32 %v1548, %v1557
    %1559 = vset.pattern.permute.xlu0 15
    %1560 = vperm.xlu0 %1559, %v1401
    %v1561 = vpop.permute.xlu0 %1560
    %v1563 = vlaneseq
    %v1564 = vshrl.u32 %v1563, 7
    %v1565 = vsub.s32 7, %v1564
    %v1566 = vrot.slane %v1407, %v1565
    %v1567 = vmul.f32 %v1561, %v1566
    %v1568 = vmax.f32 %v1558, %v1567
    %1569 = vset.pattern.permute.xlu0 16
    %1570 = vperm.xlu0 %1569, %v1401
    %v1571 = vpop.permute.xlu0 %1570
    %v1573 = vlaneseq
    %v1574 = vshrl.u32 %v1573, 7
    %v1575 = vsub.s32 0, %v1574
    %v1576 = vrot.slane %v1408, %v1575
    %v1577 = vmul.f32 %v1571, %v1576
    %v1578 = vmax.f32 %v1568, %v1577
    %1579 = vset.pattern.permute.xlu0 17
    %1580 = vperm.xlu0 %1579, %v1401
    %v1581 = vpop.permute.xlu0 %1580
    %v1583 = vlaneseq
    %v1584 = vshrl.u32 %v1583, 7
    %v1585 = vsub.s32 1, %v1584
    %v1586 = vrot.slane %v1408, %v1585
    %v1587 = vmul.f32 %v1581, %v1586
    %v1588 = vmax.f32 %v1578, %v1587
    %1589 = vset.pattern.permute.xlu0 18
    %1590 = vperm.xlu0 %1589, %v1401
    %v1591 = vpop.permute.xlu0 %1590
    %v1593 = vlaneseq
    %v1594 = vshrl.u32 %v1593, 7
    %v1595 = vsub.s32 2, %v1594
    %v1596 = vrot.slane %v1408, %v1595
    %v1597 = vmul.f32 %v1591, %v1596
    %v1598 = vmax.f32 %v1588, %v1597
    %1599 = vset.pattern.permute.xlu0 19
    %1600 = vperm.xlu0 %1599, %v1401
    %v1601 = vpop.permute.xlu0 %1600
    %v1603 = vlaneseq
    %v1604 = vshrl.u32 %v1603, 7
    %v1605 = vsub.s32 3, %v1604
    %v1606 = vrot.slane %v1408, %v1605
    %v1607 = vmul.f32 %v1601, %v1606
    %v1608 = vmax.f32 %v1598, %v1607
    %1609 = vst [vmem:[#allocation13] sm:$0xff] %v1608
    // Predicated region
    $region58: #{tpu_custom_call.1} parent=1 // pred_check
      _
    $region59: #{tpu_custom_call.1} parent=1 // pred_check_branch
      %1611 = sbr.rel (0) target = $region61
    $region60: #{tpu_custom_call.1} parent=1 // pred_region
      %s1613 = ssub.s32 128, 32
      %1614 = vsyncadd [#allocation4], %s1613
      %s1615 = sshll.u32 [#allocation13], 4
      %s1616 = int_to_ptr.vmem [resolvable:$true] %s1615
      %1621 = dma.vmem_to_hbm [thread:$0]  %s1616, 32, %s8, [#allocation4], 32, 32, 2
    $region61: #{tpu_custom_call.1} parent=1 // pred_fallthru
      _
    // Predicated region
    $region62: #{tpu_custom_call.1} parent=1 // pred_check
      _
    $region63: #{tpu_custom_call.1} parent=1 // pred_check_branch
      %1623 = sbr.rel (0) target = $region65
    $region64: #{tpu_custom_call.1} parent=1 // pred_region
      %1624 = dma.done [#allocation4], 128
    $region65: #{tpu_custom_call.1} parent=1 // pred_fallthru
      _
    %1625 = vsyncpa [#allocation3], 1
    %1626 = vsyncpa [#allocation6], 1
    %1627 = vsyncpa [#allocation9], 1
    %1628 = vsyncpa [#allocation12], 1
    %1629 = vsyncpa [#allocation4], 1

</llo_original>
